<compile_context>
chip_gen: v5e
topology: v5e:2x2
jax: 0.10.0
libtpu: 0.0.40
codegen_flags: <defaults>
</compile_context>

<pallas_src>
import functools

import jax
import jax.numpy as jnp
from jax.experimental import pallas as pl
from jax.experimental.pallas import tpu as pltpu


def _round_up(v, m):
    return ((v + m - 1) // m) * m


def _vmem_limit_bytes():
    # ~3/4 of per-core VMEM: ~48 MiB on v7x (64 MiB), ~96 MiB on v5e/v6e (128 MiB).
    try:
        cap = int(pltpu.get_tpu_info().vmem_capacity_bytes)
    except Exception:  # conservative fallback
        cap = 64 * 1024 * 1024
    return int(min(cap * 3 // 4, 112 * 1024 * 1024))


def _kv_proj_kernel(cpt_ref, cptT_ref, wkT_ref, bkT_ref, wv_ref, bv_ref,
                    kT_ref, v_ref, *, num_heads):
    """One-shot head-major K^T / V projection of the (batch-independent) concepts.

      kT_ref[h] = (concepts @ Wk_h + bk_h)^T : (Dh, Mp)
      v_ref[h]  =  concepts @ Wv_h + bv_h    : (Mp, Dh)

    K^T is produced via Wk_h^T @ concepts^T (transposed operands prepared
    once in the wrapper), so the kernel uses only 2-D dots — no in-kernel
    transposes or reshapes.
    """
    cpt = cpt_ref[...]                                    # (Mp, C)  bf16
    cptT = cptT_ref[...]                                  # (C, Mp)  bf16
    for h in range(num_heads):
        kT = jnp.dot(wkT_ref[h], cptT, preferred_element_type=jnp.float32)
        kT_ref[h] = (kT + bkT_ref[h]).astype(kT_ref.dtype)           # (Dh, Mp)
        vh = jnp.dot(cpt, wv_ref[h], preferred_element_type=jnp.float32)
        v_ref[h] = (vh + bv_ref[h]).astype(v_ref.dtype)              # (Mp, Dh)


def _attn_kernel(x_ref, kT_ref, v_ref, wq_ref, bq_ref, wo_ref, bo_ref,
                 y_ref, attn_ref, *, num_heads, scale, m_valid):
    x = x_ref[...]                                        # (TM, C) bf16
    m_pad = kT_ref.shape[-1]

    mask_bias = None
    if m_valid < m_pad:
        # Mask lane padding of the concept axis -> exactly zero probability.
        col = jax.lax.broadcasted_iota(jnp.int32, (1, m_pad), 1)
        mask_bias = jnp.where(col < m_valid, 0.0, -1e30).astype(jnp.float32)

    y_acc = None          # (TM, Op) f32 fused output-projection accumulator
    a_acc = None          # (TM, Mp) f32 head-summed attention

    for h in range(num_heads):
        # Q_h: full-C contraction against the head-major weight slice
        # (no lane slicing / stacking of a pre-computed q).
        q = jnp.dot(x, wq_ref[h], preferred_element_type=jnp.float32)
        q = ((q + bq_ref[h]) * scale).astype(jnp.bfloat16)            # (TM, Dh)

        # Scores against pre-transposed K_h (Dh, Mp): standard matmul form,
        # no per-step relayout of the grid-invariant K.
        s = jnp.dot(q, kT_ref[h], preferred_element_type=jnp.float32)  # (TM, Mp)
        if mask_bias is not None:
            s = s + mask_bias

        # Row softmax in f32 (VPU/EUP); denominator via approx reciprocal.
        s = s - jnp.max(s, axis=-1, keepdims=True)
        p = jnp.exp(s)
        p = p * pl.reciprocal(jnp.sum(p, axis=-1, keepdims=True), approx=True)
        a_acc = p if a_acc is None else a_acc + p

        # Context + its output-projection contribution, accumulated in f32:
        # no (H, TM, Op) intermediate, no separate head-sum.
        ctx = jnp.dot(p.astype(jnp.bfloat16), v_ref[h],
                      preferred_element_type=jnp.float32).astype(jnp.bfloat16)
        yp = jnp.dot(ctx, wo_ref[h], preferred_element_type=jnp.float32)
        y_acc = yp if y_acc is None else y_acc + yp

    y_ref[...] = (y_acc + bo_ref[...]).astype(y_ref.dtype)
    attn_ref[...] = (a_acc * (1.0 / num_heads)).astype(attn_ref.dtype)


def cross_attention(x, concepts, params, *, num_heads, row_tile=512):
    """x: (B, N, C) f32, concepts: (M, C) f32. Returns ((B,N,n_out), (B,N,M))."""
    B, N, C = x.shape
    M, _ = concepts.shape
    n_out = params["wo"].shape[1]
    H = num_heads
    Dh = C // H
    scale = Dh ** (-0.5)

    LANE = 128
    RG = 16                              # row-tile granularity (bf16 sublane tile)
    m_pad = _round_up(M, LANE)           # lane-dense attention output / masked softmax
    o_pad = _round_up(n_out, LANE)       # lane-dense y output

    rows = B * N
    rows_g = _round_up(rows, RG)
    tm = _round_up(min(row_tile, rows_g), RG)
    # Guarantee >= 2 grid steps when rows permit (megacore parallel axis on v7x).
    if rows_g >= 2 * RG and tm >= rows_g:
        tm = _round_up(rows_g // 2, RG)
    rows_pad = _round_up(rows_g, tm)

    vmem_limit = _vmem_limit_bytes()

    # ---- one-off wrapper layout plumbing (inputs / parameters only) --------
    xf = x.reshape(rows, C)
    if rows_pad != rows:
        xf = jnp.pad(xf, ((0, rows_pad - rows), (0, 0)))
    xf = xf.astype(jnp.bfloat16)

    cpt = concepts
    if m_pad != M:
        cpt = jnp.pad(cpt, ((0, m_pad - M), (0, 0)))
    cpt = cpt.astype(jnp.bfloat16)
    cptT = cpt.T                                            # (C, Mp)

    # Head-major parameter layouts.
    wq_hm = params["wq"].reshape(C, H, Dh).transpose(1, 0, 2).astype(jnp.bfloat16)   # (H, C, Dh)
    bq_hm = params["bq"].reshape(H, Dh)[:, None, :].astype(jnp.float32)              # (H, 1, Dh)
    wkT_hm = params["wk"].T.reshape(H, Dh, C).astype(jnp.bfloat16)                   # (H, Dh, C)
    bkT_hm = params["bk"].reshape(H, Dh)[:, :, None].astype(jnp.float32)             # (H, Dh, 1)
    wv_hm = params["wv"].reshape(C, H, Dh).transpose(1, 0, 2).astype(jnp.bfloat16)   # (H, C, Dh)
    bv_hm = params["bv"].reshape(H, Dh)[:, None, :].astype(jnp.float32)              # (H, 1, Dh)

    wo_p = jnp.pad(params["wo"], ((0, 0), (0, o_pad - n_out)))
    bo_p = jnp.pad(params["bo"], ((0, 0), (0, o_pad - n_out))).astype(jnp.float32)   # (1, Op)
    wo_hm = wo_p.reshape(H, Dh, o_pad).astype(jnp.bfloat16)                          # (H, Dh, Op)

    # ---- K/V projection: computed once, emitted head-major -----------------
    kT, v = pl.pallas_call(
        functools.partial(_kv_proj_kernel, num_heads=H),
        out_shape=(jax.ShapeDtypeStruct((H, Dh, m_pad), jnp.bfloat16),
                   jax.ShapeDtypeStruct((H, m_pad, Dh), jnp.bfloat16)),
        grid_spec=pltpu.PrefetchScalarGridSpec(
            num_scalar_prefetch=0,
            grid=(1,),
            in_specs=[
                pl.BlockSpec((m_pad, C), lambda i: (0, 0)),       # concepts (padded)
                pl.BlockSpec((C, m_pad), lambda i: (0, 0)),       # concepts^T
                pl.BlockSpec((H, Dh, C), lambda i: (0, 0, 0)),    # Wk^T head-major
                pl.BlockSpec((H, Dh, 1), lambda i: (0, 0, 0)),    # bk head-major
                pl.BlockSpec((H, C, Dh), lambda i: (0, 0, 0)),    # Wv head-major
                pl.BlockSpec((H, 1, Dh), lambda i: (0, 0, 0)),    # bv head-major
            ],
            out_specs=[
                pl.BlockSpec((H, Dh, m_pad), lambda i: (0, 0, 0)),
                pl.BlockSpec((H, m_pad, Dh), lambda i: (0, 0, 0)),
            ],
        ),
        compiler_params=pltpu.CompilerParams(
            dimension_semantics=("arbitrary",),
            vmem_limit_bytes=vmem_limit),
    )(cpt, cptT, wkT_hm, bkT_hm, wv_hm, bv_hm)

    # ---- attention over row tiles of the flattened (B*N, C) queries --------
    kernel = functools.partial(_attn_kernel, num_heads=H, scale=scale, m_valid=M)

    inv = lambda shape: pl.BlockSpec(shape, lambda i, s=shape: (0,) * len(s))

    y_pad, attn_pad = pl.pallas_call(
        kernel,
        out_shape=(jax.ShapeDtypeStruct((rows_pad, o_pad), x.dtype),
                   jax.ShapeDtypeStruct((rows_pad, m_pad), jnp.bfloat16)),
        grid_spec=pltpu.PrefetchScalarGridSpec(
            num_scalar_prefetch=0,
            grid=(rows_pad // tm,),
            in_specs=[
                pl.BlockSpec((tm, C), lambda i: (i, 0)),    # x row tile
                inv((H, Dh, m_pad)),                        # K^T (head-major, invariant)
                inv((H, m_pad, Dh)),                        # V   (head-major, invariant)
                inv((H, C, Dh)),                            # Wq  (head-major)
                inv((H, 1, Dh)),                            # bq
                inv((H, Dh, o_pad)),                        # Wo  (head-major)
                inv((1, o_pad)),                            # bo
            ],
            out_specs=[
                pl.BlockSpec((tm, o_pad), lambda i: (i, 0)),   # y (lane-dense, padded)
                pl.BlockSpec((tm, m_pad), lambda i: (i, 0)),   # head-mean attention (bf16)
            ],
        ),
        compiler_params=pltpu.CompilerParams(
            dimension_semantics=("parallel",),
            vmem_limit_bytes=vmem_limit),
    )(xf, kT, v, wq_hm, bq_hm, wo_hm, bo_p)

    y = y_pad[:rows, :n_out].reshape(B, N, n_out)
    attn_mean = attn_pad[:rows, :M].astype(jnp.float32).reshape(B, N, M)
    return y, attn_mean


def _reference(x, concepts, params, *, num_heads):
    # Pure-JAX f32 reference mirroring the PyTorch forward (eval mode).
    B, N, C = x.shape
    M = concepts.shape[0]
    Dh = C // num_heads
    scale = Dh ** (-0.5)

    q = x @ params["wq"] + params["bq"][0]                       # (B, N, C)
    k = concepts @ params["wk"] + params["bk"][0]                # (M, C)
    v = concepts @ params["wv"] + params["bv"][0]                # (M, C)

    qh = q.reshape(B, N, num_heads, Dh).transpose(0, 2, 1, 3)    # (B, H, N, Dh)
    kh = k.reshape(1, M, num_heads, Dh).transpose(0, 2, 1, 3)    # (1, H, M, Dh)
    vh = v.reshape(1, M, num_heads, Dh).transpose(0, 2, 1, 3)    # (1, H, M, Dh)

    attn = jnp.einsum("bhnd,zhmd->bhnm", qh, kh) * scale
    attn = jax.nn.softmax(attn, axis=-1)
    ctx = jnp.einsum("bhnm,zhmd->bhnd", attn, vh)
    ctx = ctx.transpose(0, 2, 1, 3).reshape(B, N, C)
    y = ctx @ params["wo"] + params["bo"][0]
    return y, attn.mean(axis=1)


def _init_params(key, dim, n_outputs):
    # Deterministic init mimicking nn.Linear default (uniform ±1/sqrt(fan_in)).
    keys = jax.random.split(key, 8)
    def lin(kw, kb, fan_in, fan_out):
        bound = 1.0 / (fan_in ** 0.5)
        w = jax.random.uniform(kw, (fan_in, fan_out), jnp.float32, -bound, bound)
        b = jax.random.uniform(kb, (1, fan_out), jnp.float32, -bound, bound)
        return w, b
    wq, bq = lin(keys[0], keys[1], dim, dim)
    wk, bk = lin(keys[2], keys[3], dim, dim)
    wv, bv = lin(keys[4], keys[5], dim, dim)
    wo, bo = lin(keys[6], keys[7], dim, n_outputs)
    return dict(wq=wq, bq=bq, wk=wk, bk=bk, wv=wv, bv=bv, wo=wo, bo=bo)


if __name__ == "__main__":
    B, N, C = 2, 8, 32          # batch, seq, dim
    M = 8                       # number of concepts
    num_heads = 8
    n_outputs = 16

    key = jax.random.PRNGKey(0)
    kx, kc, kp = jax.random.split(key, 3)
    x = jax.random.normal(kx, (B, N, C), jnp.float32)
    concepts = jax.random.normal(kc, (M, C), jnp.float32)
    params = _init_params(kp, C, n_outputs)

    y, attn_mean = cross_attention(x, concepts, params, num_heads=num_heads)
    y = jax.block_until_ready(y)
    attn_mean = jax.block_until_ready(attn_mean)

    y_ref, attn_ref = _reference(x, concepts, params, num_heads=num_heads)
    assert y.shape == (B, N, n_outputs)
    assert attn_mean.shape == (B, N, M)
    # bf16 MXU inputs + approx reciprocal + bf16 attention writeback
    # -> loosened tolerances vs the f32 reference.
    assert jnp.allclose(y, y_ref, atol=3e-2, rtol=3e-2), \
        float(jnp.max(jnp.abs(y - y_ref)))
    assert jnp.allclose(attn_mean, attn_ref, atol=2e-2, rtol=3e-2), \
        float(jnp.max(jnp.abs(attn_mean - attn_ref)))

    print("KERNEL_OK")
</pallas_src>

<mosaic_0001>
module attributes {stable_mosaic.version = 11 : i64} {
  func.func @_kv_proj_kernel(%arg0: i32, %arg1: memref<128x32xbf16, #tpu.memory_space<vmem>>, %arg2: memref<32x128xbf16, #tpu.memory_space<vmem>>, %arg3: memref<8x4x32xbf16, #tpu.memory_space<vmem>>, %arg4: memref<8x4x1xf32, #tpu.memory_space<vmem>>, %arg5: memref<8x32x4xbf16, #tpu.memory_space<vmem>>, %arg6: memref<8x1x4xf32, #tpu.memory_space<vmem>>, %arg7: memref<8x4x128xbf16, #tpu.memory_space<vmem>>, %arg8: memref<8x128x4xbf16, #tpu.memory_space<vmem>>) attributes {dimension_semantics = [#tpu.dimension_semantics<arbitrary>], iteration_bounds = array<i64: 1>, scalar_prefetch = 0 : i64, scratch_operands = 0 : i64, tpu.core_type = #tpu.core_type<tc>, window_params = [{pipeline_mode = #tpu.pipeline_mode<synchronous>, transform_indices = @transform_0, window_bounds = array<i64: 128, 32>}, {pipeline_mode = #tpu.pipeline_mode<synchronous>, transform_indices = @transform_1, window_bounds = array<i64: 32, 128>}, {pipeline_mode = #tpu.pipeline_mode<synchronous>, transform_indices = @transform_2, window_bounds = array<i64: 8, 4, 32>}, {pipeline_mode = #tpu.pipeline_mode<synchronous>, transform_indices = @transform_3, window_bounds = array<i64: 8, 4, 1>}, {pipeline_mode = #tpu.pipeline_mode<synchronous>, transform_indices = @transform_4, window_bounds = array<i64: 8, 32, 4>}, {pipeline_mode = #tpu.pipeline_mode<synchronous>, transform_indices = @transform_5, window_bounds = array<i64: 8, 1, 4>}, {pipeline_mode = #tpu.pipeline_mode<synchronous>, transform_indices = @transform_6, window_bounds = array<i64: 8, 4, 128>}, {pipeline_mode = #tpu.pipeline_mode<synchronous>, transform_indices = @transform_7, window_bounds = array<i64: 8, 128, 4>}]} {
    %c0 = arith.constant 0 : index
    %c0_0 = arith.constant 0 : index
    %0 = vector.load %arg1[%c0, %c0_0] : memref<128x32xbf16, #tpu.memory_space<vmem>>, vector<128x32xbf16>
    %c0_1 = arith.constant 0 : index
    %c0_2 = arith.constant 0 : index
    %1 = vector.load %arg2[%c0_1, %c0_2] : memref<32x128xbf16, #tpu.memory_space<vmem>>, vector<32x128xbf16>
    %c0_3 = arith.constant 0 : index
    %c0_4 = arith.constant 0 : index
    %c0_5 = arith.constant 0 : index
    %2 = vector.load %arg3[%c0_3, %c0_4, %c0_5] : memref<8x4x32xbf16, #tpu.memory_space<vmem>>, vector<1x4x32xbf16>
    %3 = vector.shape_cast %2 : vector<1x4x32xbf16> to vector<4x32xbf16>
    %cst = arith.constant dense<0.000000e+00> : vector<4x128xf32>
    %4 = tpu.matmul %3, %1, %cst {dimension_numbers = #tpu.dot_dimension_numbers<[1], [0], [0], [1], [0, 0, 1, 1], [], []>} : vector<4x32xbf16>, vector<32x128xbf16>, vector<4x128xf32> -> vector<4x128xf32>
    %c0_6 = arith.constant 0 : index
    %c0_7 = arith.constant 0 : index
    %c0_8 = arith.constant 0 : index
    %5 = vector.load %arg4[%c0_6, %c0_7, %c0_8] : memref<8x4x1xf32, #tpu.memory_space<vmem>>, vector<1x4x1xf32>
    %6 = vector.shape_cast %5 : vector<1x4x1xf32> to vector<4x1xf32>
    %7 = vector.broadcast %6 : vector<4x1xf32> to vector<4x128xf32>
    %8 = arith.addf %4, %7 : vector<4x128xf32>
    %9 = arith.truncf %8 : vector<4x128xf32> to vector<4x128xbf16>
    %c0_9 = arith.constant 0 : index
    %c0_10 = arith.constant 0 : index
    %c0_11 = arith.constant 0 : index
    %10 = vector.load %arg7[%c0_9, %c0_10, %c0_11] : memref<8x4x128xbf16, #tpu.memory_space<vmem>>, vector<1x4x128xbf16>
    %11 = vector.shape_cast %10 : vector<1x4x128xbf16> to vector<4x128xbf16>
    %12 = vector.shape_cast %9 : vector<4x128xbf16> to vector<1x4x128xbf16>
    tpu.vector_store %arg7[%c0_9, %c0_10, %c0_11], %12 {strides = array<i32>} : memref<8x4x128xbf16, #tpu.memory_space<vmem>>, vector<1x4x128xbf16>,
    %c0_12 = arith.constant 0 : index
    %c0_13 = arith.constant 0 : index
    %c0_14 = arith.constant 0 : index
    %13 = vector.load %arg5[%c0_12, %c0_13, %c0_14] : memref<8x32x4xbf16, #tpu.memory_space<vmem>>, vector<1x32x4xbf16>
    %14 = vector.shape_cast %13 : vector<1x32x4xbf16> to vector<32x4xbf16>
    %cst_15 = arith.constant dense<0.000000e+00> : vector<128x4xf32>
    %15 = tpu.matmul %0, %14, %cst_15 {dimension_numbers = #tpu.dot_dimension_numbers<[1], [0], [0], [1], [0, 0, 1, 1], [], []>} : vector<128x32xbf16>, vector<32x4xbf16>, vector<128x4xf32> -> vector<128x4xf32>
    %c0_16 = arith.constant 0 : index
    %c0_17 = arith.constant 0 : index
    %c0_18 = arith.constant 0 : index
    %16 = vector.load %arg6[%c0_16, %c0_17, %c0_18] : memref<8x1x4xf32, #tpu.memory_space<vmem>>, vector<1x1x4xf32>
    %17 = vector.shape_cast %16 : vector<1x1x4xf32> to vector<1x4xf32>
    %18 = vector.broadcast %17 : vector<1x4xf32> to vector<128x4xf32>
    %19 = arith.addf %15, %18 : vector<128x4xf32>
    %20 = arith.truncf %19 : vector<128x4xf32> to vector<128x4xbf16>
    %c0_19 = arith.constant 0 : index
    %c0_20 = arith.constant 0 : index
    %c0_21 = arith.constant 0 : index
    %21 = vector.load %arg8[%c0_19, %c0_20, %c0_21] : memref<8x128x4xbf16, #tpu.memory_space<vmem>>, vector<1x128x4xbf16>
    %22 = vector.shape_cast %21 : vector<1x128x4xbf16> to vector<128x4xbf16>
    %23 = vector.shape_cast %20 : vector<128x4xbf16> to vector<1x128x4xbf16>
    tpu.vector_store %arg8[%c0_19, %c0_20, %c0_21], %23 {strides = array<i32>} : memref<8x128x4xbf16, #tpu.memory_space<vmem>>, vector<1x128x4xbf16>,
    %c1 = arith.constant 1 : index
    %c0_22 = arith.constant 0 : index
    %c0_23 = arith.constant 0 : index
    %24 = vector.load %arg3[%c1, %c0_22, %c0_23] : memref<8x4x32xbf16, #tpu.memory_space<vmem>>, vector<1x4x32xbf16>
    %25 = vector.shape_cast %24 : vector<1x4x32xbf16> to vector<4x32xbf16>
    %cst_24 = arith.constant dense<0.000000e+00> : vector<4x128xf32>
    %26 = tpu.matmul %25, %1, %cst_24 {dimension_numbers = #tpu.dot_dimension_numbers<[1], [0], [0], [1], [0, 0, 1, 1], [], []>} : vector<4x32xbf16>, vector<32x128xbf16>, vector<4x128xf32> -> vector<4x128xf32>
    %c1_25 = arith.constant 1 : index
    %c0_26 = arith.constant 0 : index
    %c0_27 = arith.constant 0 : index
    %27 = vector.load %arg4[%c1_25, %c0_26, %c0_27] : memref<8x4x1xf32, #tpu.memory_space<vmem>>, vector<1x4x1xf32>
    %28 = vector.shape_cast %27 : vector<1x4x1xf32> to vector<4x1xf32>
    %29 = vector.broadcast %28 : vector<4x1xf32> to vector<4x128xf32>
    %30 = arith.addf %26, %29 : vector<4x128xf32>
    %31 = arith.truncf %30 : vector<4x128xf32> to vector<4x128xbf16>
    %c1_28 = arith.constant 1 : index
    %c0_29 = arith.constant 0 : index
    %c0_30 = arith.constant 0 : index
    %32 = vector.load %arg7[%c1_28, %c0_29, %c0_30] : memref<8x4x128xbf16, #tpu.memory_space<vmem>>, vector<1x4x128xbf16>
    %33 = vector.shape_cast %32 : vector<1x4x128xbf16> to vector<4x128xbf16>
    %34 = vector.shape_cast %31 : vector<4x128xbf16> to vector<1x4x128xbf16>
    tpu.vector_store %arg7[%c1_28, %c0_29, %c0_30], %34 {strides = array<i32>} : memref<8x4x128xbf16, #tpu.memory_space<vmem>>, vector<1x4x128xbf16>,
    %c1_31 = arith.constant 1 : index
    %c0_32 = arith.constant 0 : index
    %c0_33 = arith.constant 0 : index
    %35 = vector.load %arg5[%c1_31, %c0_32, %c0_33] : memref<8x32x4xbf16, #tpu.memory_space<vmem>>, vector<1x32x4xbf16>
    %36 = vector.shape_cast %35 : vector<1x32x4xbf16> to vector<32x4xbf16>
    %cst_34 = arith.constant dense<0.000000e+00> : vector<128x4xf32>
    %37 = tpu.matmul %0, %36, %cst_34 {dimension_numbers = #tpu.dot_dimension_numbers<[1], [0], [0], [1], [0, 0, 1, 1], [], []>} : vector<128x32xbf16>, vector<32x4xbf16>, vector<128x4xf32> -> vector<128x4xf32>
    %c1_35 = arith.constant 1 : index
    %c0_36 = arith.constant 0 : index
    %c0_37 = arith.constant 0 : index
    %38 = vector.load %arg6[%c1_35, %c0_36, %c0_37] : memref<8x1x4xf32, #tpu.memory_space<vmem>>, vector<1x1x4xf32>
    %39 = vector.shape_cast %38 : vector<1x1x4xf32> to vector<1x4xf32>
    %40 = vector.broadcast %39 : vector<1x4xf32> to vector<128x4xf32>
    %41 = arith.addf %37, %40 : vector<128x4xf32>
    %42 = arith.truncf %41 : vector<128x4xf32> to vector<128x4xbf16>
    %c1_38 = arith.constant 1 : index
    %c0_39 = arith.constant 0 : index
    %c0_40 = arith.constant 0 : index
    %43 = vector.load %arg8[%c1_38, %c0_39, %c0_40] : memref<8x128x4xbf16, #tpu.memory_space<vmem>>, vector<1x128x4xbf16>
    %44 = vector.shape_cast %43 : vector<1x128x4xbf16> to vector<128x4xbf16>
    %45 = vector.shape_cast %42 : vector<128x4xbf16> to vector<1x128x4xbf16>
    tpu.vector_store %arg8[%c1_38, %c0_39, %c0_40], %45 {strides = array<i32>} : memref<8x128x4xbf16, #tpu.memory_space<vmem>>, vector<1x128x4xbf16>,
    %c2 = arith.constant 2 : index
    %c0_41 = arith.constant 0 : index
    %c0_42 = arith.constant 0 : index
    %46 = vector.load %arg3[%c2, %c0_41, %c0_42] : memref<8x4x32xbf16, #tpu.memory_space<vmem>>, vector<1x4x32xbf16>
    %47 = vector.shape_cast %46 : vector<1x4x32xbf16> to vector<4x32xbf16>
    %cst_43 = arith.constant dense<0.000000e+00> : vector<4x128xf32>
    %48 = tpu.matmul %47, %1, %cst_43 {dimension_numbers = #tpu.dot_dimension_numbers<[1], [0], [0], [1], [0, 0, 1, 1], [], []>} : vector<4x32xbf16>, vector<32x128xbf16>, vector<4x128xf32> -> vector<4x128xf32>
    %c2_44 = arith.constant 2 : index
    %c0_45 = arith.constant 0 : index
    %c0_46 = arith.constant 0 : index
    %49 = vector.load %arg4[%c2_44, %c0_45, %c0_46] : memref<8x4x1xf32, #tpu.memory_space<vmem>>, vector<1x4x1xf32>
    %50 = vector.shape_cast %49 : vector<1x4x1xf32> to vector<4x1xf32>
    %51 = vector.broadcast %50 : vector<4x1xf32> to vector<4x128xf32>
    %52 = arith.addf %48, %51 : vector<4x128xf32>
    %53 = arith.truncf %52 : vector<4x128xf32> to vector<4x128xbf16>
    %c2_47 = arith.constant 2 : index
    %c0_48 = arith.constant 0 : index
    %c0_49 = arith.constant 0 : index
    %54 = vector.load %arg7[%c2_47, %c0_48, %c0_49] : memref<8x4x128xbf16, #tpu.memory_space<vmem>>, vector<1x4x128xbf16>
    %55 = vector.shape_cast %54 : vector<1x4x128xbf16> to vector<4x128xbf16>
    %56 = vector.shape_cast %53 : vector<4x128xbf16> to vector<1x4x128xbf16>
    tpu.vector_store %arg7[%c2_47, %c0_48, %c0_49], %56 {strides = array<i32>} : memref<8x4x128xbf16, #tpu.memory_space<vmem>>, vector<1x4x128xbf16>,
    %c2_50 = arith.constant 2 : index
    %c0_51 = arith.constant 0 : index
    %c0_52 = arith.constant 0 : index
    %57 = vector.load %arg5[%c2_50, %c0_51, %c0_52] : memref<8x32x4xbf16, #tpu.memory_space<vmem>>, vector<1x32x4xbf16>
    %58 = vector.shape_cast %57 : vector<1x32x4xbf16> to vector<32x4xbf16>
    %cst_53 = arith.constant dense<0.000000e+00> : vector<128x4xf32>
    %59 = tpu.matmul %0, %58, %cst_53 {dimension_numbers = #tpu.dot_dimension_numbers<[1], [0], [0], [1], [0, 0, 1, 1], [], []>} : vector<128x32xbf16>, vector<32x4xbf16>, vector<128x4xf32> -> vector<128x4xf32>
    %c2_54 = arith.constant 2 : index
    %c0_55 = arith.constant 0 : index
    %c0_56 = arith.constant 0 : index
    %60 = vector.load %arg6[%c2_54, %c0_55, %c0_56] : memref<8x1x4xf32, #tpu.memory_space<vmem>>, vector<1x1x4xf32>
    %61 = vector.shape_cast %60 : vector<1x1x4xf32> to vector<1x4xf32>
    %62 = vector.broadcast %61 : vector<1x4xf32> to vector<128x4xf32>
    %63 = arith.addf %59, %62 : vector<128x4xf32>
    %64 = arith.truncf %63 : vector<128x4xf32> to vector<128x4xbf16>
    %c2_57 = arith.constant 2 : index
    %c0_58 = arith.constant 0 : index
    %c0_59 = arith.constant 0 : index
    %65 = vector.load %arg8[%c2_57, %c0_58, %c0_59] : memref<8x128x4xbf16, #tpu.memory_space<vmem>>, vector<1x128x4xbf16>
    %66 = vector.shape_cast %65 : vector<1x128x4xbf16> to vector<128x4xbf16>
    %67 = vector.shape_cast %64 : vector<128x4xbf16> to vector<1x128x4xbf16>
    tpu.vector_store %arg8[%c2_57, %c0_58, %c0_59], %67 {strides = array<i32>} : memref<8x128x4xbf16, #tpu.memory_space<vmem>>, vector<1x128x4xbf16>,
    %c3 = arith.constant 3 : index
    %c0_60 = arith.constant 0 : index
    %c0_61 = arith.constant 0 : index
    %68 = vector.load %arg3[%c3, %c0_60, %c0_61] : memref<8x4x32xbf16, #tpu.memory_space<vmem>>, vector<1x4x32xbf16>
    %69 = vector.shape_cast %68 : vector<1x4x32xbf16> to vector<4x32xbf16>
    %cst_62 = arith.constant dense<0.000000e+00> : vector<4x128xf32>
    %70 = tpu.matmul %69, %1, %cst_62 {dimension_numbers = #tpu.dot_dimension_numbers<[1], [0], [0], [1], [0, 0, 1, 1], [], []>} : vector<4x32xbf16>, vector<32x128xbf16>, vector<4x128xf32> -> vector<4x128xf32>
    %c3_63 = arith.constant 3 : index
    %c0_64 = arith.constant 0 : index
    %c0_65 = arith.constant 0 : index
    %71 = vector.load %arg4[%c3_63, %c0_64, %c0_65] : memref<8x4x1xf32, #tpu.memory_space<vmem>>, vector<1x4x1xf32>
    %72 = vector.shape_cast %71 : vector<1x4x1xf32> to vector<4x1xf32>
    %73 = vector.broadcast %72 : vector<4x1xf32> to vector<4x128xf32>
    %74 = arith.addf %70, %73 : vector<4x128xf32>
    %75 = arith.truncf %74 : vector<4x128xf32> to vector<4x128xbf16>
    %c3_66 = arith.constant 3 : index
    %c0_67 = arith.constant 0 : index
    %c0_68 = arith.constant 0 : index
    %76 = vector.load %arg7[%c3_66, %c0_67, %c0_68] : memref<8x4x128xbf16, #tpu.memory_space<vmem>>, vector<1x4x128xbf16>
    %77 = vector.shape_cast %76 : vector<1x4x128xbf16> to vector<4x128xbf16>
    %78 = vector.shape_cast %75 : vector<4x128xbf16> to vector<1x4x128xbf16>
    tpu.vector_store %arg7[%c3_66, %c0_67, %c0_68], %78 {strides = array<i32>} : memref<8x4x128xbf16, #tpu.memory_space<vmem>>, vector<1x4x128xbf16>,
    %c3_69 = arith.constant 3 : index
    %c0_70 = arith.constant 0 : index
    %c0_71 = arith.constant 0 : index
    %79 = vector.load %arg5[%c3_69, %c0_70, %c0_71] : memref<8x32x4xbf16, #tpu.memory_space<vmem>>, vector<1x32x4xbf16>
    %80 = vector.shape_cast %79 : vector<1x32x4xbf16> to vector<32x4xbf16>
    %cst_72 = arith.constant dense<0.000000e+00> : vector<128x4xf32>
    %81 = tpu.matmul %0, %80, %cst_72 {dimension_numbers = #tpu.dot_dimension_numbers<[1], [0], [0], [1], [0, 0, 1, 1], [], []>} : vector<128x32xbf16>, vector<32x4xbf16>, vector<128x4xf32> -> vector<128x4xf32>
    %c3_73 = arith.constant 3 : index
    %c0_74 = arith.constant 0 : index
    %c0_75 = arith.constant 0 : index
    %82 = vector.load %arg6[%c3_73, %c0_74, %c0_75] : memref<8x1x4xf32, #tpu.memory_space<vmem>>, vector<1x1x4xf32>
    %83 = vector.shape_cast %82 : vector<1x1x4xf32> to vector<1x4xf32>
    %84 = vector.broadcast %83 : vector<1x4xf32> to vector<128x4xf32>
    %85 = arith.addf %81, %84 : vector<128x4xf32>
    %86 = arith.truncf %85 : vector<128x4xf32> to vector<128x4xbf16>
    %c3_76 = arith.constant 3 : index
    %c0_77 = arith.constant 0 : index
    %c0_78 = arith.constant 0 : index
    %87 = vector.load %arg8[%c3_76, %c0_77, %c0_78] : memref<8x128x4xbf16, #tpu.memory_space<vmem>>, vector<1x128x4xbf16>
    %88 = vector.shape_cast %87 : vector<1x128x4xbf16> to vector<128x4xbf16>
    %89 = vector.shape_cast %86 : vector<128x4xbf16> to vector<1x128x4xbf16>
    tpu.vector_store %arg8[%c3_76, %c0_77, %c0_78], %89 {strides = array<i32>} : memref<8x128x4xbf16, #tpu.memory_space<vmem>>, vector<1x128x4xbf16>,
    %c4 = arith.constant 4 : index
    %c0_79 = arith.constant 0 : index
    %c0_80 = arith.constant 0 : index
    %90 = vector.load %arg3[%c4, %c0_79, %c0_80] : memref<8x4x32xbf16, #tpu.memory_space<vmem>>, vector<1x4x32xbf16>
    %91 = vector.shape_cast %90 : vector<1x4x32xbf16> to vector<4x32xbf16>
    %cst_81 = arith.constant dense<0.000000e+00> : vector<4x128xf32>
    %92 = tpu.matmul %91, %1, %cst_81 {dimension_numbers = #tpu.dot_dimension_numbers<[1], [0], [0], [1], [0, 0, 1, 1], [], []>} : vector<4x32xbf16>, vector<32x128xbf16>, vector<4x128xf32> -> vector<4x128xf32>
    %c4_82 = arith.constant 4 : index
    %c0_83 = arith.constant 0 : index
    %c0_84 = arith.constant 0 : index
    %93 = vector.load %arg4[%c4_82, %c0_83, %c0_84] : memref<8x4x1xf32, #tpu.memory_space<vmem>>, vector<1x4x1xf32>
    %94 = vector.shape_cast %93 : vector<1x4x1xf32> to vector<4x1xf32>
    %95 = vector.broadcast %94 : vector<4x1xf32> to vector<4x128xf32>
    %96 = arith.addf %92, %95 : vector<4x128xf32>
    %97 = arith.truncf %96 : vector<4x128xf32> to vector<4x128xbf16>
    %c4_85 = arith.constant 4 : index
    %c0_86 = arith.constant 0 : index
    %c0_87 = arith.constant 0 : index
    %98 = vector.load %arg7[%c4_85, %c0_86, %c0_87] : memref<8x4x128xbf16, #tpu.memory_space<vmem>>, vector<1x4x128xbf16>
    %99 = vector.shape_cast %98 : vector<1x4x128xbf16> to vector<4x128xbf16>
    %100 = vector.shape_cast %97 : vector<4x128xbf16> to vector<1x4x128xbf16>
    tpu.vector_store %arg7[%c4_85, %c0_86, %c0_87], %100 {strides = array<i32>} : memref<8x4x128xbf16, #tpu.memory_space<vmem>>, vector<1x4x128xbf16>,
    %c4_88 = arith.constant 4 : index
    %c0_89 = arith.constant 0 : index
    %c0_90 = arith.constant 0 : index
    %101 = vector.load %arg5[%c4_88, %c0_89, %c0_90] : memref<8x32x4xbf16, #tpu.memory_space<vmem>>, vector<1x32x4xbf16>
    %102 = vector.shape_cast %101 : vector<1x32x4xbf16> to vector<32x4xbf16>
    %cst_91 = arith.constant dense<0.000000e+00> : vector<128x4xf32>
    %103 = tpu.matmul %0, %102, %cst_91 {dimension_numbers = #tpu.dot_dimension_numbers<[1], [0], [0], [1], [0, 0, 1, 1], [], []>} : vector<128x32xbf16>, vector<32x4xbf16>, vector<128x4xf32> -> vector<128x4xf32>
    %c4_92 = arith.constant 4 : index
    %c0_93 = arith.constant 0 : index
    %c0_94 = arith.constant 0 : index
    %104 = vector.load %arg6[%c4_92, %c0_93, %c0_94] : memref<8x1x4xf32, #tpu.memory_space<vmem>>, vector<1x1x4xf32>
    %105 = vector.shape_cast %104 : vector<1x1x4xf32> to vector<1x4xf32>
    %106 = vector.broadcast %105 : vector<1x4xf32> to vector<128x4xf32>
    %107 = arith.addf %103, %106 : vector<128x4xf32>
    %108 = arith.truncf %107 : vector<128x4xf32> to vector<128x4xbf16>
    %c4_95 = arith.constant 4 : index
    %c0_96 = arith.constant 0 : index
    %c0_97 = arith.constant 0 : index
    %109 = vector.load %arg8[%c4_95, %c0_96, %c0_97] : memref<8x128x4xbf16, #tpu.memory_space<vmem>>, vector<1x128x4xbf16>
    %110 = vector.shape_cast %109 : vector<1x128x4xbf16> to vector<128x4xbf16>
    %111 = vector.shape_cast %108 : vector<128x4xbf16> to vector<1x128x4xbf16>
    tpu.vector_store %arg8[%c4_95, %c0_96, %c0_97], %111 {strides = array<i32>} : memref<8x128x4xbf16, #tpu.memory_space<vmem>>, vector<1x128x4xbf16>,
    %c5 = arith.constant 5 : index
    %c0_98 = arith.constant 0 : index
    %c0_99 = arith.constant 0 : index
    %112 = vector.load %arg3[%c5, %c0_98, %c0_99] : memref<8x4x32xbf16, #tpu.memory_space<vmem>>, vector<1x4x32xbf16>
    %113 = vector.shape_cast %112 : vector<1x4x32xbf16> to vector<4x32xbf16>
    %cst_100 = arith.constant dense<0.000000e+00> : vector<4x128xf32>
    %114 = tpu.matmul %113, %1, %cst_100 {dimension_numbers = #tpu.dot_dimension_numbers<[1], [0], [0], [1], [0, 0, 1, 1], [], []>} : vector<4x32xbf16>, vector<32x128xbf16>, vector<4x128xf32> -> vector<4x128xf32>
    %c5_101 = arith.constant 5 : index
    %c0_102 = arith.constant 0 : index
    %c0_103 = arith.constant 0 : index
    %115 = vector.load %arg4[%c5_101, %c0_102, %c0_103] : memref<8x4x1xf32, #tpu.memory_space<vmem>>, vector<1x4x1xf32>
    %116 = vector.shape_cast %115 : vector<1x4x1xf32> to vector<4x1xf32>
    %117 = vector.broadcast %116 : vector<4x1xf32> to vector<4x128xf32>
    %118 = arith.addf %114, %117 : vector<4x128xf32>
    %119 = arith.truncf %118 : vector<4x128xf32> to vector<4x128xbf16>
    %c5_104 = arith.constant 5 : index
    %c0_105 = arith.constant 0 : index
    %c0_106 = arith.constant 0 : index
    %120 = vector.load %arg7[%c5_104, %c0_105, %c0_106] : memref<8x4x128xbf16, #tpu.memory_space<vmem>>, vector<1x4x128xbf16>
    %121 = vector.shape_cast %120 : vector<1x4x128xbf16> to vector<4x128xbf16>
    %122 = vector.shape_cast %119 : vector<4x128xbf16> to vector<1x4x128xbf16>
    tpu.vector_store %arg7[%c5_104, %c0_105, %c0_106], %122 {strides = array<i32>} : memref<8x4x128xbf16, #tpu.memory_space<vmem>>, vector<1x4x128xbf16>,
    %c5_107 = arith.constant 5 : index
    %c0_108 = arith.constant 0 : index
    %c0_109 = arith.constant 0 : index
    %123 = vector.load %arg5[%c5_107, %c0_108, %c0_109] : memref<8x32x4xbf16, #tpu.memory_space<vmem>>, vector<1x32x4xbf16>
    %124 = vector.shape_cast %123 : vector<1x32x4xbf16> to vector<32x4xbf16>
    %cst_110 = arith.constant dense<0.000000e+00> : vector<128x4xf32>
    %125 = tpu.matmul %0, %124, %cst_110 {dimension_numbers = #tpu.dot_dimension_numbers<[1], [0], [0], [1], [0, 0, 1, 1], [], []>} : vector<128x32xbf16>, vector<32x4xbf16>, vector<128x4xf32> -> vector<128x4xf32>
    %c5_111 = arith.constant 5 : index
    %c0_112 = arith.constant 0 : index
    %c0_113 = arith.constant 0 : index
    %126 = vector.load %arg6[%c5_111, %c0_112, %c0_113] : memref<8x1x4xf32, #tpu.memory_space<vmem>>, vector<1x1x4xf32>
    %127 = vector.shape_cast %126 : vector<1x1x4xf32> to vector<1x4xf32>
    %128 = vector.broadcast %127 : vector<1x4xf32> to vector<128x4xf32>
    %129 = arith.addf %125, %128 : vector<128x4xf32>
    %130 = arith.truncf %129 : vector<128x4xf32> to vector<128x4xbf16>
    %c5_114 = arith.constant 5 : index
    %c0_115 = arith.constant 0 : index
    %c0_116 = arith.constant 0 : index
    %131 = vector.load %arg8[%c5_114, %c0_115, %c0_116] : memref<8x128x4xbf16, #tpu.memory_space<vmem>>, vector<1x128x4xbf16>
    %132 = vector.shape_cast %131 : vector<1x128x4xbf16> to vector<128x4xbf16>
    %133 = vector.shape_cast %130 : vector<128x4xbf16> to vector<1x128x4xbf16>
    tpu.vector_store %arg8[%c5_114, %c0_115, %c0_116], %133 {strides = array<i32>} : memref<8x128x4xbf16, #tpu.memory_space<vmem>>, vector<1x128x4xbf16>,
    %c6 = arith.constant 6 : index
    %c0_117 = arith.constant 0 : index
    %c0_118 = arith.constant 0 : index
    %134 = vector.load %arg3[%c6, %c0_117, %c0_118] : memref<8x4x32xbf16, #tpu.memory_space<vmem>>, vector<1x4x32xbf16>
    %135 = vector.shape_cast %134 : vector<1x4x32xbf16> to vector<4x32xbf16>
    %cst_119 = arith.constant dense<0.000000e+00> : vector<4x128xf32>
    %136 = tpu.matmul %135, %1, %cst_119 {dimension_numbers = #tpu.dot_dimension_numbers<[1], [0], [0], [1], [0, 0, 1, 1], [], []>} : vector<4x32xbf16>, vector<32x128xbf16>, vector<4x128xf32> -> vector<4x128xf32>
    %c6_120 = arith.constant 6 : index
    %c0_121 = arith.constant 0 : index
    %c0_122 = arith.constant 0 : index
    %137 = vector.load %arg4[%c6_120, %c0_121, %c0_122] : memref<8x4x1xf32, #tpu.memory_space<vmem>>, vector<1x4x1xf32>
    %138 = vector.shape_cast %137 : vector<1x4x1xf32> to vector<4x1xf32>
    %139 = vector.broadcast %138 : vector<4x1xf32> to vector<4x128xf32>
    %140 = arith.addf %136, %139 : vector<4x128xf32>
    %141 = arith.truncf %140 : vector<4x128xf32> to vector<4x128xbf16>
    %c6_123 = arith.constant 6 : index
    %c0_124 = arith.constant 0 : index
    %c0_125 = arith.constant 0 : index
    %142 = vector.load %arg7[%c6_123, %c0_124, %c0_125] : memref<8x4x128xbf16, #tpu.memory_space<vmem>>, vector<1x4x128xbf16>
    %143 = vector.shape_cast %142 : vector<1x4x128xbf16> to vector<4x128xbf16>
    %144 = vector.shape_cast %141 : vector<4x128xbf16> to vector<1x4x128xbf16>
    tpu.vector_store %arg7[%c6_123, %c0_124, %c0_125], %144 {strides = array<i32>} : memref<8x4x128xbf16, #tpu.memory_space<vmem>>, vector<1x4x128xbf16>,
    %c6_126 = arith.constant 6 : index
    %c0_127 = arith.constant 0 : index
    %c0_128 = arith.constant 0 : index
    %145 = vector.load %arg5[%c6_126, %c0_127, %c0_128] : memref<8x32x4xbf16, #tpu.memory_space<vmem>>, vector<1x32x4xbf16>
    %146 = vector.shape_cast %145 : vector<1x32x4xbf16> to vector<32x4xbf16>
    %cst_129 = arith.constant dense<0.000000e+00> : vector<128x4xf32>
    %147 = tpu.matmul %0, %146, %cst_129 {dimension_numbers = #tpu.dot_dimension_numbers<[1], [0], [0], [1], [0, 0, 1, 1], [], []>} : vector<128x32xbf16>, vector<32x4xbf16>, vector<128x4xf32> -> vector<128x4xf32>
    %c6_130 = arith.constant 6 : index
    %c0_131 = arith.constant 0 : index
    %c0_132 = arith.constant 0 : index
    %148 = vector.load %arg6[%c6_130, %c0_131, %c0_132] : memref<8x1x4xf32, #tpu.memory_space<vmem>>, vector<1x1x4xf32>
    %149 = vector.shape_cast %148 : vector<1x1x4xf32> to vector<1x4xf32>
    %150 = vector.broadcast %149 : vector<1x4xf32> to vector<128x4xf32>
    %151 = arith.addf %147, %150 : vector<128x4xf32>
    %152 = arith.truncf %151 : vector<128x4xf32> to vector<128x4xbf16>
    %c6_133 = arith.constant 6 : index
    %c0_134 = arith.constant 0 : index
    %c0_135 = arith.constant 0 : index
    %153 = vector.load %arg8[%c6_133, %c0_134, %c0_135] : memref<8x128x4xbf16, #tpu.memory_space<vmem>>, vector<1x128x4xbf16>
    %154 = vector.shape_cast %153 : vector<1x128x4xbf16> to vector<128x4xbf16>
    %155 = vector.shape_cast %152 : vector<128x4xbf16> to vector<1x128x4xbf16>
    tpu.vector_store %arg8[%c6_133, %c0_134, %c0_135], %155 {strides = array<i32>} : memref<8x128x4xbf16, #tpu.memory_space<vmem>>, vector<1x128x4xbf16>,
    %c7 = arith.constant 7 : index
    %c0_136 = arith.constant 0 : index
    %c0_137 = arith.constant 0 : index
    %156 = vector.load %arg3[%c7, %c0_136, %c0_137] : memref<8x4x32xbf16, #tpu.memory_space<vmem>>, vector<1x4x32xbf16>
    %157 = vector.shape_cast %156 : vector<1x4x32xbf16> to vector<4x32xbf16>
    %cst_138 = arith.constant dense<0.000000e+00> : vector<4x128xf32>
    %158 = tpu.matmul %157, %1, %cst_138 {dimension_numbers = #tpu.dot_dimension_numbers<[1], [0], [0], [1], [0, 0, 1, 1], [], []>} : vector<4x32xbf16>, vector<32x128xbf16>, vector<4x128xf32> -> vector<4x128xf32>
    %c7_139 = arith.constant 7 : index
    %c0_140 = arith.constant 0 : index
    %c0_141 = arith.constant 0 : index
    %159 = vector.load %arg4[%c7_139, %c0_140, %c0_141] : memref<8x4x1xf32, #tpu.memory_space<vmem>>, vector<1x4x1xf32>
    %160 = vector.shape_cast %159 : vector<1x4x1xf32> to vector<4x1xf32>
    %161 = vector.broadcast %160 : vector<4x1xf32> to vector<4x128xf32>
    %162 = arith.addf %158, %161 : vector<4x128xf32>
    %163 = arith.truncf %162 : vector<4x128xf32> to vector<4x128xbf16>
    %c7_142 = arith.constant 7 : index
    %c0_143 = arith.constant 0 : index
    %c0_144 = arith.constant 0 : index
    %164 = vector.load %arg7[%c7_142, %c0_143, %c0_144] : memref<8x4x128xbf16, #tpu.memory_space<vmem>>, vector<1x4x128xbf16>
    %165 = vector.shape_cast %164 : vector<1x4x128xbf16> to vector<4x128xbf16>
    %166 = vector.shape_cast %163 : vector<4x128xbf16> to vector<1x4x128xbf16>
    tpu.vector_store %arg7[%c7_142, %c0_143, %c0_144], %166 {strides = array<i32>} : memref<8x4x128xbf16, #tpu.memory_space<vmem>>, vector<1x4x128xbf16>,
    %c7_145 = arith.constant 7 : index
    %c0_146 = arith.constant 0 : index
    %c0_147 = arith.constant 0 : index
    %167 = vector.load %arg5[%c7_145, %c0_146, %c0_147] : memref<8x32x4xbf16, #tpu.memory_space<vmem>>, vector<1x32x4xbf16>
    %168 = vector.shape_cast %167 : vector<1x32x4xbf16> to vector<32x4xbf16>
    %cst_148 = arith.constant dense<0.000000e+00> : vector<128x4xf32>
    %169 = tpu.matmul %0, %168, %cst_148 {dimension_numbers = #tpu.dot_dimension_numbers<[1], [0], [0], [1], [0, 0, 1, 1], [], []>} : vector<128x32xbf16>, vector<32x4xbf16>, vector<128x4xf32> -> vector<128x4xf32>
    %c7_149 = arith.constant 7 : index
    %c0_150 = arith.constant 0 : index
    %c0_151 = arith.constant 0 : index
    %170 = vector.load %arg6[%c7_149, %c0_150, %c0_151] : memref<8x1x4xf32, #tpu.memory_space<vmem>>, vector<1x1x4xf32>
    %171 = vector.shape_cast %170 : vector<1x1x4xf32> to vector<1x4xf32>
    %172 = vector.broadcast %171 : vector<1x4xf32> to vector<128x4xf32>
    %173 = arith.addf %169, %172 : vector<128x4xf32>
    %174 = arith.truncf %173 : vector<128x4xf32> to vector<128x4xbf16>
    %c7_152 = arith.constant 7 : index
    %c0_153 = arith.constant 0 : index
    %c0_154 = arith.constant 0 : index
    %175 = vector.load %arg8[%c7_152, %c0_153, %c0_154] : memref<8x128x4xbf16, #tpu.memory_space<vmem>>, vector<1x128x4xbf16>
    %176 = vector.shape_cast %175 : vector<1x128x4xbf16> to vector<128x4xbf16>
    %177 = vector.shape_cast %174 : vector<128x4xbf16> to vector<1x128x4xbf16>
    tpu.vector_store %arg8[%c7_152, %c0_153, %c0_154], %177 {strides = array<i32>} : memref<8x128x4xbf16, #tpu.memory_space<vmem>>, vector<1x128x4xbf16>,
    return
  }
  func.func @transform_0(%arg0: i32) -> (i32, i32) {
    %c0_i32 = arith.constant 0 : i32
    %c0_i32_0 = arith.constant 0 : i32
    %c0_i32_1 = arith.constant 0 : i32
    return %c0_i32, %c0_i32_0 : i32, i32
  }
  func.func @transform_1(%arg0: i32) -> (i32, i32) {
    %c0_i32 = arith.constant 0 : i32
    %c0_i32_0 = arith.constant 0 : i32
    %c0_i32_1 = arith.constant 0 : i32
    return %c0_i32, %c0_i32_0 : i32, i32
  }
  func.func @transform_2(%arg0: i32) -> (i32, i32, i32) {
    %c0_i32 = arith.constant 0 : i32
    %c0_i32_0 = arith.constant 0 : i32
    %c0_i32_1 = arith.constant 0 : i32
    %c0_i32_2 = arith.constant 0 : i32
    return %c0_i32, %c0_i32_0, %c0_i32_1 : i32, i32, i32
  }
  func.func @transform_3(%arg0: i32) -> (i32, i32, i32) {
    %c0_i32 = arith.constant 0 : i32
    %c0_i32_0 = arith.constant 0 : i32
    %c0_i32_1 = arith.constant 0 : i32
    %c0_i32_2 = arith.constant 0 : i32
    return %c0_i32, %c0_i32_0, %c0_i32_1 : i32, i32, i32
  }
  func.func @transform_4(%arg0: i32) -> (i32, i32, i32) {
    %c0_i32 = arith.constant 0 : i32
    %c0_i32_0 = arith.constant 0 : i32
    %c0_i32_1 = arith.constant 0 : i32
    %c0_i32_2 = arith.constant 0 : i32
    return %c0_i32, %c0_i32_0, %c0_i32_1 : i32, i32, i32
  }
  func.func @transform_5(%arg0: i32) -> (i32, i32, i32) {
    %c0_i32 = arith.constant 0 : i32
    %c0_i32_0 = arith.constant 0 : i32
    %c0_i32_1 = arith.constant 0 : i32
    %c0_i32_2 = arith.constant 0 : i32
    return %c0_i32, %c0_i32_0, %c0_i32_1 : i32, i32, i32
  }
  func.func @transform_6(%arg0: i32) -> (i32, i32, i32) {
    %c0_i32 = arith.constant 0 : i32
    %c0_i32_0 = arith.constant 0 : i32
    %c0_i32_1 = arith.constant 0 : i32
    %c0_i32_2 = arith.constant 0 : i32
    return %c0_i32, %c0_i32_0, %c0_i32_1 : i32, i32, i32
  }
  func.func @transform_7(%arg0: i32) -> (i32, i32, i32) {
    %c0_i32 = arith.constant 0 : i32
    %c0_i32_0 = arith.constant 0 : i32
    %c0_i32_1 = arith.constant 0 : i32
    %c0_i32_2 = arith.constant 0 : i32
    return %c0_i32, %c0_i32_0, %c0_i32_1 : i32, i32, i32
  }
}

</mosaic_0001>

<llo_original>
// kernel: tpu_custom_call.1
$region0: #{tpu_custom_call.1}
  #allocation0 [shape = 'u32[]', space=smem, size = 0x4, offset = 0x4, fixed_abs, tag = 'smem constant byte address 0x4 - core index']
  #allocation1 [shape = 'u32[72,128]{1,0:T(1,128)}', space=vmem, size = 0x9000, scoped, tag = 'internal scratch']
  %s0 = inlined_call_operand.vmem [shape: bf16[128,32], index: 0, kind: input, shape index: {}]
  %s1 = inlined_call_operand.vmem [shape: bf16[32,128], index: 1, kind: input, shape index: {}]
  %s2 = inlined_call_operand.vmem [shape: bf16[8,4,32], index: 2, kind: input, shape index: {}]
  %s3 = inlined_call_operand.vmem [shape: f32[8,4,1], index: 3, kind: input, shape index: {}]
  %s4 = inlined_call_operand.vmem [shape: bf16[8,32,4], index: 4, kind: input, shape index: {}]
  %s5 = inlined_call_operand.vmem [shape: f32[8,1,4], index: 5, kind: input, shape index: {}]
  %s6 = inlined_call_operand.hbm [shape: bf16[8,4,128], index: 6, kind: output, shape index: {0}]
  %s7 = inlined_call_operand.vmem [shape: bf16[8,128,4], index: 7, kind: output, shape index: {1}]
  %8 = xla_tuple %s6, %s7
  %s9 = sld [smem:[#allocation0]]
  $region42: #{tpu_custom_call.1} parent=0
    _
  %s11 = ssub.s32 1, %s9
  %s12 = scalar_select 0, %s11, %s9
  $region1: #{tpu_custom_call.1} parent=0
    #allocation2 [shape = 'u8[8192]{0}', space=vmem, size = 0x2000, scoped, tag = 'output window, operand 0, single buffered']
    #allocation3 [shape = 's32[1]{0}', space=sflag, size = 0x4, scoped, tag = 'scoped memory for tpu_custom_call.1']
    %13 = vsyncpa [#allocation3], 0
    // Predicated region
    $region2: #{tpu_custom_call.1} parent=1 // pred_check
      _
    $region3: #{tpu_custom_call.1} parent=1 // pred_check_branch
      %15 = sbr.rel (0) target = $region5
    $region4: #{tpu_custom_call.1} parent=1 // pred_region
      _
    $region5: #{tpu_custom_call.1} parent=1 // pred_fallthru
      _
    // Predicated region
    $region6: #{tpu_custom_call.1} parent=1 // pred_check
      _
    $region7: #{tpu_custom_call.1} parent=1 // pred_check_branch
      %17 = sbr.rel (0) target = $region9
    $region8: #{tpu_custom_call.1} parent=1 // pred_region
      _
    $region9: #{tpu_custom_call.1} parent=1 // pred_fallthru
      _
    // Predicated region
    $region10: #{tpu_custom_call.1} parent=1 // pred_check
      _
    $region11: #{tpu_custom_call.1} parent=1 // pred_check_branch
      %19 = sbr.rel (0) target = $region13
    $region12: #{tpu_custom_call.1} parent=1 // pred_region
      _
    $region13: #{tpu_custom_call.1} parent=1 // pred_fallthru
      _
    // Predicated region
    $region14: #{tpu_custom_call.1} parent=1 // pred_check
      _
    $region15: #{tpu_custom_call.1} parent=1 // pred_check_branch
      %21 = sbr.rel (0) target = $region17
    $region16: #{tpu_custom_call.1} parent=1 // pred_region
      _
    $region17: #{tpu_custom_call.1} parent=1 // pred_fallthru
      _
    // Predicated region
    $region18: #{tpu_custom_call.1} parent=1 // pred_check
      _
    $region19: #{tpu_custom_call.1} parent=1 // pred_check_branch
      %23 = sbr.rel (0) target = $region21
    $region20: #{tpu_custom_call.1} parent=1 // pred_region
      _
    $region21: #{tpu_custom_call.1} parent=1 // pred_fallthru
      _
    // Predicated region
    $region22: #{tpu_custom_call.1} parent=1 // pred_check
      _
    $region23: #{tpu_custom_call.1} parent=1 // pred_check_branch
      %25 = sbr.rel (0) target = $region25
    $region24: #{tpu_custom_call.1} parent=1 // pred_region
      _
    $region25: #{tpu_custom_call.1} parent=1 // pred_fallthru
      _
    %v27 = vld [vmem:[%s0] sm:$0xf]
    %v28 = vld [vmem:[%s0 + $0x4] sm:$0xf]
    %v29 = vld [vmem:[%s0 + $0x8] sm:$0xf]
    %v30 = vld [vmem:[%s0 + $0xc] sm:$0xf]
    %v31 = vld [vmem:[%s0 + $0x10] sm:$0xf]
    %v32 = vld [vmem:[%s0 + $0x14] sm:$0xf]
    %v33 = vld [vmem:[%s0 + $0x18] sm:$0xf]
    %v34 = vld [vmem:[%s0 + $0x1c] sm:$0xf]
    %v35 = vld [vmem:[%s0 + $0x20] sm:$0xf]
    %v36 = vld [vmem:[%s0 + $0x24] sm:$0xf]
    %v37 = vld [vmem:[%s0 + $0x28] sm:$0xf]
    %v38 = vld [vmem:[%s0 + $0x2c] sm:$0xf]
    %v39 = vld [vmem:[%s0 + $0x30] sm:$0xf]
    %v40 = vld [vmem:[%s0 + $0x34] sm:$0xf]
    %v41 = vld [vmem:[%s0 + $0x38] sm:$0xf]
    %v42 = vld [vmem:[%s0 + $0x3c] sm:$0xf]
    %v43 = vld [vmem:[%s1] sm:$0xf]
    %v44 = vld [vmem:[%s1 + $0x4] sm:$0xf]
    %v45 = vld [vmem:[%s1 + $0x8] sm:$0xf]
    %v46 = vld [vmem:[%s1 + $0xc] sm:$0xf]
    %v47 = vld [vmem:[%s2] sm:$0x3]
    %v48 = vld [vmem:[%s3] sm:$0xf]
    %50 = vset.pattern.permute.xlu0 0
    %51 = vperm.xlu0 %50, %v48
    %v52 = vpop.permute.xlu0 %51
    %v58 = vunpack.c.l.b16 %v43
    %v59 = vunpack.c.l.b16 %v44
    %v60 = vunpack.c.l.b16 %v45
    %v61 = vunpack.c.l.b16 %v46
    %v62 = vpack.c.b16 %v59, %v58
    %v63 = vpack.c.b16 %v61, %v60
    %vm66 = vcmask 261120
    %v68 = vsel %vm66, %v47, 0
    %70 = vmatpush.bf16.msra.mxu0 0
    %71 = vmatpush.bf16.msra.mxu0 0
    %72 = vmatpush.bf16.msra.mxu0 0
    %73 = vmatpush.bf16.msra.mxu0 0
    %74 = vmatpush.bf16.msra.mxu0 0
    %75 = vmatpush.bf16.msra.mxu0 0
    %76 = vmatpush.bf16.msra.mxu0 %v63
    %77 = vmatpush.bf16.msra.mxu0 %v62
    %78 = vmatmul.bf16.gmra.mxu0 %v68
    %v79 = vpop.f32.mrf.mxu0
    %v80 = vadd.f32 %v52, %v79
    %v81 = vpop.f32.mrf.mxu0
    %82 = vdwg.mxu0
    %v83 = vpack.c.bf16 %v80, %v80
    %84 = vst [vmem:[#allocation2] sm:$0x3] %v83
    %v85 = vld [vmem:[%s4] sm:$0xf]
    %v86 = vld [vmem:[%s4 + $0x4] sm:$0xf]
    %v87 = vld [vmem:[%s4 + $0x8] sm:$0xf]
    %v88 = vld [vmem:[%s4 + $0xc] sm:$0xf]
    %v89 = vld [vmem:[%s5] sm:$0x1]
    %v91 = vperm.slane %v89, 0
    %v109 = vunpack.c.l.b16 %v27
    %v110 = vunpack.c.l.b16 %v28
    %v111 = vunpack.c.l.b16 %v29
    %v112 = vunpack.c.l.b16 %v30
    %v113 = vunpack.c.l.b16 %v31
    %v114 = vunpack.c.l.b16 %v32
    %v115 = vunpack.c.l.b16 %v33
    %v116 = vunpack.c.l.b16 %v34
    %v117 = vunpack.c.l.b16 %v35
    %v118 = vunpack.c.l.b16 %v36
    %v119 = vunpack.c.l.b16 %v37
    %v120 = vunpack.c.l.b16 %v38
    %v121 = vunpack.c.l.b16 %v39
    %v122 = vunpack.c.l.b16 %v40
    %v123 = vunpack.c.l.b16 %v41
    %v124 = vunpack.c.l.b16 %v42
    %v125 = vpack.c.b16 %v110, %v109
    %v126 = vpack.c.b16 %v112, %v111
    %v127 = vpack.c.b16 %v114, %v113
    %v128 = vpack.c.b16 %v116, %v115
    %v129 = vpack.c.b16 %v118, %v117
    %v130 = vpack.c.b16 %v120, %v119
    %v131 = vpack.c.b16 %v122, %v121
    %v132 = vpack.c.b16 %v124, %v123
    %v137 = vunpack.c.l.b16 %v85
    %v138 = vunpack.c.l.b16 %v86
    %v139 = vunpack.c.l.b16 %v87
    %v140 = vunpack.c.l.b16 %v88
    %v141 = vpack.c.b16 %v138, %v137
    %v142 = vpack.c.b16 %v140, %v139
    %v146 = vsel %vm66, %v125, 0
    %v149 = vsel %vm66, %v126, 0
    %v152 = vsel %vm66, %v127, 0
    %v155 = vsel %vm66, %v128, 0
    %v158 = vsel %vm66, %v129, 0
    %v161 = vsel %vm66, %v130, 0
    %v164 = vsel %vm66, %v131, 0
    %v167 = vsel %vm66, %v132, 0
    %169 = vmatpush.bf16.msra.mxu0 0
    %170 = vmatpush.bf16.msra.mxu0 0
    %171 = vmatpush.bf16.msra.mxu0 0
    %172 = vmatpush.bf16.msra.mxu0 0
    %173 = vmatpush.bf16.msra.mxu0 0
    %174 = vmatpush.bf16.msra.mxu0 0
    %175 = vmatpush.bf16.msra.mxu0 %v142
    %176 = vmatpush.bf16.msra.mxu0 %v141
    %177 = vmatmul.bf16.gmra.mxu0 %v146
    %v178 = vpop.f32.mrf.mxu0
    %v179 = vadd.f32 %v91, %v178
    %v180 = vpop.f32.mrf.mxu0
    %v181 = vadd.f32 %v91, %v180
    %182 = vmatmul.bf16.gmra.mxu0 %v149
    %v183 = vpop.f32.mrf.mxu0
    %v184 = vadd.f32 %v91, %v183
    %v185 = vpop.f32.mrf.mxu0
    %v186 = vadd.f32 %v91, %v185
    %187 = vmatmul.bf16.gmra.mxu0 %v152
    %v188 = vpop.f32.mrf.mxu0
    %v189 = vadd.f32 %v91, %v188
    %v190 = vpop.f32.mrf.mxu0
    %v191 = vadd.f32 %v91, %v190
    %192 = vmatmul.bf16.gmra.mxu0 %v155
    %v193 = vpop.f32.mrf.mxu0
    %v194 = vadd.f32 %v91, %v193
    %v195 = vpop.f32.mrf.mxu0
    %v196 = vadd.f32 %v91, %v195
    %197 = vmatmul.bf16.gmra.mxu0 %v158
    %v198 = vpop.f32.mrf.mxu0
    %v199 = vadd.f32 %v91, %v198
    %v200 = vpop.f32.mrf.mxu0
    %v201 = vadd.f32 %v91, %v200
    %202 = vmatmul.bf16.gmra.mxu0 %v161
    %v203 = vpop.f32.mrf.mxu0
    %v204 = vadd.f32 %v91, %v203
    %v205 = vpop.f32.mrf.mxu0
    %v206 = vadd.f32 %v91, %v205
    %207 = vmatmul.bf16.gmra.mxu0 %v164
    %v208 = vpop.f32.mrf.mxu0
    %v209 = vadd.f32 %v91, %v208
    %v210 = vpop.f32.mrf.mxu0
    %v211 = vadd.f32 %v91, %v210
    %212 = vmatmul.bf16.gmra.mxu0 %v167
    %v213 = vpop.f32.mrf.mxu0
    %v214 = vadd.f32 %v91, %v213
    %v215 = vpop.f32.mrf.mxu0
    %v216 = vadd.f32 %v91, %v215
    %217 = vdwg.mxu0
    %v218 = vpack.c.bf16 %v179, %v179
    %v219 = vpack.c.bf16 %v181, %v181
    %v220 = vpack.c.bf16 %v184, %v184
    %v221 = vpack.c.bf16 %v186, %v186
    %v222 = vpack.c.bf16 %v189, %v189
    %v223 = vpack.c.bf16 %v191, %v191
    %v224 = vpack.c.bf16 %v194, %v194
    %v225 = vpack.c.bf16 %v196, %v196
    %v226 = vpack.c.bf16 %v199, %v199
    %v227 = vpack.c.bf16 %v201, %v201
    %v228 = vpack.c.bf16 %v204, %v204
    %v229 = vpack.c.bf16 %v206, %v206
    %v230 = vpack.c.bf16 %v209, %v209
    %v231 = vpack.c.bf16 %v211, %v211
    %v232 = vpack.c.bf16 %v214, %v214
    %v233 = vpack.c.bf16 %v216, %v216
    %vm234 = vcmask 27648
    %235 = vst.msk [vmem:[%s7] sm:$0xf] %vm234, %v218
    %236 = vst.msk [vmem:[%s7 + $0x4] sm:$0xf] %vm234, %v219
    %237 = vst.msk [vmem:[%s7 + $0x8] sm:$0xf] %vm234, %v220
    %238 = vst.msk [vmem:[%s7 + $0xc] sm:$0xf] %vm234, %v221
    %239 = vst.msk [vmem:[%s7 + $0x10] sm:$0xf] %vm234, %v222
    %240 = vst.msk [vmem:[%s7 + $0x14] sm:$0xf] %vm234, %v223
    %241 = vst.msk [vmem:[%s7 + $0x18] sm:$0xf] %vm234, %v224
    %242 = vst.msk [vmem:[%s7 + $0x1c] sm:$0xf] %vm234, %v225
    %243 = vst.msk [vmem:[%s7 + $0x20] sm:$0xf] %vm234, %v226
    %244 = vst.msk [vmem:[%s7 + $0x24] sm:$0xf] %vm234, %v227
    %245 = vst.msk [vmem:[%s7 + $0x28] sm:$0xf] %vm234, %v228
    %246 = vst.msk [vmem:[%s7 + $0x2c] sm:$0xf] %vm234, %v229
    %247 = vst.msk [vmem:[%s7 + $0x30] sm:$0xf] %vm234, %v230
    %248 = vst.msk [vmem:[%s7 + $0x34] sm:$0xf] %vm234, %v231
    %249 = vst.msk [vmem:[%s7 + $0x38] sm:$0xf] %vm234, %v232
    %250 = vst.msk [vmem:[%s7 + $0x3c] sm:$0xf] %vm234, %v233
    %s251 = scalar_lea.vmem %s2, 2
    %v252 = vld [vmem:[%s251] sm:$0x3]
    %s253 = scalar_lea.vmem %s3, 4
    %v254 = vld [vmem:[%s253] sm:$0xf]
    %256 = vset.pattern.permute.xlu0 0
    %257 = vperm.xlu0 %256, %v254
    %v258 = vpop.permute.xlu0 %257
    %v261 = vsel %vm66, %v252, 0
    %263 = vmatpush.bf16.msra.mxu0 0
    %264 = vmatpush.bf16.msra.mxu0 0
    %265 = vmatpush.bf16.msra.mxu0 0
    %266 = vmatpush.bf16.msra.mxu0 0
    %267 = vmatpush.bf16.msra.mxu0 0
    %268 = vmatpush.bf16.msra.mxu0 0
    %269 = vmatpush.bf16.msra.mxu0 %v63
    %270 = vmatpush.bf16.msra.mxu0 %v62
    %271 = vmatmul.bf16.gmra.mxu0 %v261
    %v272 = vpop.f32.mrf.mxu0
    %v273 = vadd.f32 %v258, %v272
    %v274 = vpop.f32.mrf.mxu0
    %275 = vdwg.mxu0
    %v276 = vpack.c.bf16 %v273, %v273
    %s277 = scalar_lea.vmem [#allocation2], 2
    %278 = vst [vmem:[%s277] sm:$0x3] %v276
    %s279 = scalar_lea.vmem %s4, 16
    %v280 = vld [vmem:[%s279] sm:$0xf]
    %v281 = vld [vmem:[%s279 + $0x4] sm:$0xf]
    %v282 = vld [vmem:[%s279 + $0x8] sm:$0xf]
    %v283 = vld [vmem:[%s279 + $0xc] sm:$0xf]
    %s284 = scalar_lea.vmem %s5, 1
    %v285 = vld [vmem:[%s284] sm:$0x1]
    %v287 = vperm.slane %v285, 0
    %v293 = vunpack.c.l.b16 %v280
    %v294 = vunpack.c.l.b16 %v281
    %v295 = vunpack.c.l.b16 %v282
    %v296 = vunpack.c.l.b16 %v283
    %v297 = vpack.c.b16 %v294, %v293
    %v298 = vpack.c.b16 %v296, %v295
    %301 = vmatpush.bf16.msra.mxu0 0
    %302 = vmatpush.bf16.msra.mxu0 0
    %303 = vmatpush.bf16.msra.mxu0 0
    %304 = vmatpush.bf16.msra.mxu0 0
    %305 = vmatpush.bf16.msra.mxu0 0
    %306 = vmatpush.bf16.msra.mxu0 0
    %307 = vmatpush.bf16.msra.mxu0 %v298
    %308 = vmatpush.bf16.msra.mxu0 %v297
    %309 = vmatmul.bf16.gmra.mxu0 %v146
    %v310 = vpop.f32.mrf.mxu0
    %v311 = vadd.f32 %v287, %v310
    %v312 = vpop.f32.mrf.mxu0
    %v313 = vadd.f32 %v287, %v312
    %314 = vmatmul.bf16.gmra.mxu0 %v149
    %v315 = vpop.f32.mrf.mxu0
    %v316 = vadd.f32 %v287, %v315
    %v317 = vpop.f32.mrf.mxu0
    %v318 = vadd.f32 %v287, %v317
    %319 = vmatmul.bf16.gmra.mxu0 %v152
    %v320 = vpop.f32.mrf.mxu0
    %v321 = vadd.f32 %v287, %v320
    %v322 = vpop.f32.mrf.mxu0
    %v323 = vadd.f32 %v287, %v322
    %324 = vmatmul.bf16.gmra.mxu0 %v155
    %v325 = vpop.f32.mrf.mxu0
    %v326 = vadd.f32 %v287, %v325
    %v327 = vpop.f32.mrf.mxu0
    %v328 = vadd.f32 %v287, %v327
    %329 = vmatmul.bf16.gmra.mxu0 %v158
    %v330 = vpop.f32.mrf.mxu0
    %v331 = vadd.f32 %v287, %v330
    %v332 = vpop.f32.mrf.mxu0
    %v333 = vadd.f32 %v287, %v332
    %334 = vmatmul.bf16.gmra.mxu0 %v161
    %v335 = vpop.f32.mrf.mxu0
    %v336 = vadd.f32 %v287, %v335
    %v337 = vpop.f32.mrf.mxu0
    %v338 = vadd.f32 %v287, %v337
    %339 = vmatmul.bf16.gmra.mxu0 %v164
    %v340 = vpop.f32.mrf.mxu0
    %v341 = vadd.f32 %v287, %v340
    %v342 = vpop.f32.mrf.mxu0
    %v343 = vadd.f32 %v287, %v342
    %344 = vmatmul.bf16.gmra.mxu0 %v167
    %v345 = vpop.f32.mrf.mxu0
    %v346 = vadd.f32 %v287, %v345
    %v347 = vpop.f32.mrf.mxu0
    %v348 = vadd.f32 %v287, %v347
    %349 = vdwg.mxu0
    %v350 = vpack.c.bf16 %v311, %v311
    %v351 = vpack.c.bf16 %v313, %v313
    %v352 = vpack.c.bf16 %v316, %v316
    %v353 = vpack.c.bf16 %v318, %v318
    %v354 = vpack.c.bf16 %v321, %v321
    %v355 = vpack.c.bf16 %v323, %v323
    %v356 = vpack.c.bf16 %v326, %v326
    %v357 = vpack.c.bf16 %v328, %v328
    %v358 = vpack.c.bf16 %v331, %v331
    %v359 = vpack.c.bf16 %v333, %v333
    %v360 = vpack.c.bf16 %v336, %v336
    %v361 = vpack.c.bf16 %v338, %v338
    %v362 = vpack.c.bf16 %v341, %v341
    %v363 = vpack.c.bf16 %v343, %v343
    %v364 = vpack.c.bf16 %v346, %v346
    %v365 = vpack.c.bf16 %v348, %v348
    %s366 = scalar_lea.vmem %s7, 64
    %367 = vst.msk [vmem:[%s366] sm:$0xf] %vm234, %v350
    %368 = vst.msk [vmem:[%s366 + $0x4] sm:$0xf] %vm234, %v351
    %369 = vst.msk [vmem:[%s366 + $0x8] sm:$0xf] %vm234, %v352
    %370 = vst.msk [vmem:[%s366 + $0xc] sm:$0xf] %vm234, %v353
    %371 = vst.msk [vmem:[%s366 + $0x10] sm:$0xf] %vm234, %v354
    %372 = vst.msk [vmem:[%s366 + $0x14] sm:$0xf] %vm234, %v355
    %373 = vst.msk [vmem:[%s366 + $0x18] sm:$0xf] %vm234, %v356
    %374 = vst.msk [vmem:[%s366 + $0x1c] sm:$0xf] %vm234, %v357
    %375 = vst.msk [vmem:[%s366 + $0x20] sm:$0xf] %vm234, %v358
    %376 = vst.msk [vmem:[%s366 + $0x24] sm:$0xf] %vm234, %v359
    %377 = vst.msk [vmem:[%s366 + $0x28] sm:$0xf] %vm234, %v360
    %378 = vst.msk [vmem:[%s366 + $0x2c] sm:$0xf] %vm234, %v361
    %379 = vst.msk [vmem:[%s366 + $0x30] sm:$0xf] %vm234, %v362
    %380 = vst.msk [vmem:[%s366 + $0x34] sm:$0xf] %vm234, %v363
    %381 = vst.msk [vmem:[%s366 + $0x38] sm:$0xf] %vm234, %v364
    %382 = vst.msk [vmem:[%s366 + $0x3c] sm:$0xf] %vm234, %v365
    %s383 = scalar_lea.vmem %s2, 4
    %v384 = vld [vmem:[%s383] sm:$0x3]
    %s385 = scalar_lea.vmem %s3, 8
    %v386 = vld [vmem:[%s385] sm:$0xf]
    %388 = vset.pattern.permute.xlu0 0
    %389 = vperm.xlu0 %388, %v386
    %v390 = vpop.permute.xlu0 %389
    %v393 = vsel %vm66, %v384, 0
    %395 = vmatpush.bf16.msra.mxu0 0
    %396 = vmatpush.bf16.msra.mxu0 0
    %397 = vmatpush.bf16.msra.mxu0 0
    %398 = vmatpush.bf16.msra.mxu0 0
    %399 = vmatpush.bf16.msra.mxu0 0
    %400 = vmatpush.bf16.msra.mxu0 0
    %401 = vmatpush.bf16.msra.mxu0 %v63
    %402 = vmatpush.bf16.msra.mxu0 %v62
    %403 = vmatmul.bf16.gmra.mxu0 %v393
    %v404 = vpop.f32.mrf.mxu0
    %v405 = vadd.f32 %v390, %v404
    %v406 = vpop.f32.mrf.mxu0
    %407 = vdwg.mxu0
    %v408 = vpack.c.bf16 %v405, %v405
    %s409 = scalar_lea.vmem [#allocation2], 4
    %410 = vst [vmem:[%s409] sm:$0x3] %v408
    %s411 = scalar_lea.vmem %s4, 32
    %v412 = vld [vmem:[%s411] sm:$0xf]
    %v413 = vld [vmem:[%s411 + $0x4] sm:$0xf]
    %v414 = vld [vmem:[%s411 + $0x8] sm:$0xf]
    %v415 = vld [vmem:[%s411 + $0xc] sm:$0xf]
    %s416 = scalar_lea.vmem %s5, 2
    %v417 = vld [vmem:[%s416] sm:$0x1]
    %v419 = vperm.slane %v417, 0
    %v425 = vunpack.c.l.b16 %v412
    %v426 = vunpack.c.l.b16 %v413
    %v427 = vunpack.c.l.b16 %v414
    %v428 = vunpack.c.l.b16 %v415
    %v429 = vpack.c.b16 %v426, %v425
    %v430 = vpack.c.b16 %v428, %v427
    %433 = vmatpush.bf16.msra.mxu0 0
    %434 = vmatpush.bf16.msra.mxu0 0
    %435 = vmatpush.bf16.msra.mxu0 0
    %436 = vmatpush.bf16.msra.mxu0 0
    %437 = vmatpush.bf16.msra.mxu0 0
    %438 = vmatpush.bf16.msra.mxu0 0
    %439 = vmatpush.bf16.msra.mxu0 %v430
    %440 = vmatpush.bf16.msra.mxu0 %v429
    %441 = vmatmul.bf16.gmra.mxu0 %v146
    %v442 = vpop.f32.mrf.mxu0
    %v443 = vadd.f32 %v419, %v442
    %v444 = vpop.f32.mrf.mxu0
    %v445 = vadd.f32 %v419, %v444
    %446 = vmatmul.bf16.gmra.mxu0 %v149
    %v447 = vpop.f32.mrf.mxu0
    %v448 = vadd.f32 %v419, %v447
    %v449 = vpop.f32.mrf.mxu0
    %v450 = vadd.f32 %v419, %v449
    %451 = vmatmul.bf16.gmra.mxu0 %v152
    %v452 = vpop.f32.mrf.mxu0
    %v453 = vadd.f32 %v419, %v452
    %v454 = vpop.f32.mrf.mxu0
    %v455 = vadd.f32 %v419, %v454
    %456 = vmatmul.bf16.gmra.mxu0 %v155
    %v457 = vpop.f32.mrf.mxu0
    %v458 = vadd.f32 %v419, %v457
    %v459 = vpop.f32.mrf.mxu0
    %v460 = vadd.f32 %v419, %v459
    %461 = vmatmul.bf16.gmra.mxu0 %v158
    %v462 = vpop.f32.mrf.mxu0
    %v463 = vadd.f32 %v419, %v462
    %v464 = vpop.f32.mrf.mxu0
    %v465 = vadd.f32 %v419, %v464
    %466 = vmatmul.bf16.gmra.mxu0 %v161
    %v467 = vpop.f32.mrf.mxu0
    %v468 = vadd.f32 %v419, %v467
    %v469 = vpop.f32.mrf.mxu0
    %v470 = vadd.f32 %v419, %v469
    %471 = vmatmul.bf16.gmra.mxu0 %v164
    %v472 = vpop.f32.mrf.mxu0
    %v473 = vadd.f32 %v419, %v472
    %v474 = vpop.f32.mrf.mxu0
    %v475 = vadd.f32 %v419, %v474
    %476 = vmatmul.bf16.gmra.mxu0 %v167
    %v477 = vpop.f32.mrf.mxu0
    %v478 = vadd.f32 %v419, %v477
    %v479 = vpop.f32.mrf.mxu0
    %v480 = vadd.f32 %v419, %v479
    %481 = vdwg.mxu0
    %v482 = vpack.c.bf16 %v443, %v443
    %v483 = vpack.c.bf16 %v445, %v445
    %v484 = vpack.c.bf16 %v448, %v448
    %v485 = vpack.c.bf16 %v450, %v450
    %v486 = vpack.c.bf16 %v453, %v453
    %v487 = vpack.c.bf16 %v455, %v455
    %v488 = vpack.c.bf16 %v458, %v458
    %v489 = vpack.c.bf16 %v460, %v460
    %v490 = vpack.c.bf16 %v463, %v463
    %v491 = vpack.c.bf16 %v465, %v465
    %v492 = vpack.c.bf16 %v468, %v468
    %v493 = vpack.c.bf16 %v470, %v470
    %v494 = vpack.c.bf16 %v473, %v473
    %v495 = vpack.c.bf16 %v475, %v475
    %v496 = vpack.c.bf16 %v478, %v478
    %v497 = vpack.c.bf16 %v480, %v480
    %s498 = scalar_lea.vmem %s7, 128
    %499 = vst.msk [vmem:[%s498] sm:$0xf] %vm234, %v482
    %500 = vst.msk [vmem:[%s498 + $0x4] sm:$0xf] %vm234, %v483
    %501 = vst.msk [vmem:[%s498 + $0x8] sm:$0xf] %vm234, %v484
    %502 = vst.msk [vmem:[%s498 + $0xc] sm:$0xf] %vm234, %v485
    %503 = vst.msk [vmem:[%s498 + $0x10] sm:$0xf] %vm234, %v486
    %504 = vst.msk [vmem:[%s498 + $0x14] sm:$0xf] %vm234, %v487
    %505 = vst.msk [vmem:[%s498 + $0x18] sm:$0xf] %vm234, %v488
    %506 = vst.msk [vmem:[%s498 + $0x1c] sm:$0xf] %vm234, %v489
    %507 = vst.msk [vmem:[%s498 + $0x20] sm:$0xf] %vm234, %v490
    %508 = vst.msk [vmem:[%s498 + $0x24] sm:$0xf] %vm234, %v491
    %509 = vst.msk [vmem:[%s498 + $0x28] sm:$0xf] %vm234, %v492
    %510 = vst.msk [vmem:[%s498 + $0x2c] sm:$0xf] %vm234, %v493
    %511 = vst.msk [vmem:[%s498 + $0x30] sm:$0xf] %vm234, %v494
    %512 = vst.msk [vmem:[%s498 + $0x34] sm:$0xf] %vm234, %v495
    %513 = vst.msk [vmem:[%s498 + $0x38] sm:$0xf] %vm234, %v496
    %514 = vst.msk [vmem:[%s498 + $0x3c] sm:$0xf] %vm234, %v497
    %s515 = scalar_lea.vmem %s2, 6
    %v516 = vld [vmem:[%s515] sm:$0x3]
    %s517 = scalar_lea.vmem %s3, 12
    %v518 = vld [vmem:[%s517] sm:$0xf]
    %520 = vset.pattern.permute.xlu0 0
    %521 = vperm.xlu0 %520, %v518
    %v522 = vpop.permute.xlu0 %521
    %v525 = vsel %vm66, %v516, 0
    %527 = vmatpush.bf16.msra.mxu0 0
    %528 = vmatpush.bf16.msra.mxu0 0
    %529 = vmatpush.bf16.msra.mxu0 0
    %530 = vmatpush.bf16.msra.mxu0 0
    %531 = vmatpush.bf16.msra.mxu0 0
    %532 = vmatpush.bf16.msra.mxu0 0
    %533 = vmatpush.bf16.msra.mxu0 %v63
    %534 = vmatpush.bf16.msra.mxu0 %v62
    %535 = vmatmul.bf16.gmra.mxu0 %v525
    %v536 = vpop.f32.mrf.mxu0
    %v537 = vadd.f32 %v522, %v536
    %v538 = vpop.f32.mrf.mxu0
    %539 = vdwg.mxu0
    %v540 = vpack.c.bf16 %v537, %v537
    %s541 = scalar_lea.vmem [#allocation2], 6
    %542 = vst [vmem:[%s541] sm:$0x3] %v540
    %s543 = scalar_lea.vmem %s4, 48
    %v544 = vld [vmem:[%s543] sm:$0xf]
    %v545 = vld [vmem:[%s543 + $0x4] sm:$0xf]
    %v546 = vld [vmem:[%s543 + $0x8] sm:$0xf]
    %v547 = vld [vmem:[%s543 + $0xc] sm:$0xf]
    %s548 = scalar_lea.vmem %s5, 3
    %v549 = vld [vmem:[%s548] sm:$0x1]
    %v551 = vperm.slane %v549, 0
    %v557 = vunpack.c.l.b16 %v544
    %v558 = vunpack.c.l.b16 %v545
    %v559 = vunpack.c.l.b16 %v546
    %v560 = vunpack.c.l.b16 %v547
    %v561 = vpack.c.b16 %v558, %v557
    %v562 = vpack.c.b16 %v560, %v559
    %565 = vmatpush.bf16.msra.mxu0 0
    %566 = vmatpush.bf16.msra.mxu0 0
    %567 = vmatpush.bf16.msra.mxu0 0
    %568 = vmatpush.bf16.msra.mxu0 0
    %569 = vmatpush.bf16.msra.mxu0 0
    %570 = vmatpush.bf16.msra.mxu0 0
    %571 = vmatpush.bf16.msra.mxu0 %v562
    %572 = vmatpush.bf16.msra.mxu0 %v561
    %573 = vmatmul.bf16.gmra.mxu0 %v146
    %v574 = vpop.f32.mrf.mxu0
    %v575 = vadd.f32 %v551, %v574
    %v576 = vpop.f32.mrf.mxu0
    %v577 = vadd.f32 %v551, %v576
    %578 = vmatmul.bf16.gmra.mxu0 %v149
    %v579 = vpop.f32.mrf.mxu0
    %v580 = vadd.f32 %v551, %v579
    %v581 = vpop.f32.mrf.mxu0
    %v582 = vadd.f32 %v551, %v581
    %583 = vmatmul.bf16.gmra.mxu0 %v152
    %v584 = vpop.f32.mrf.mxu0
    %v585 = vadd.f32 %v551, %v584
    %v586 = vpop.f32.mrf.mxu0
    %v587 = vadd.f32 %v551, %v586
    %588 = vmatmul.bf16.gmra.mxu0 %v155
    %v589 = vpop.f32.mrf.mxu0
    %v590 = vadd.f32 %v551, %v589
    %v591 = vpop.f32.mrf.mxu0
    %v592 = vadd.f32 %v551, %v591
    %593 = vmatmul.bf16.gmra.mxu0 %v158
    %v594 = vpop.f32.mrf.mxu0
    %v595 = vadd.f32 %v551, %v594
    %v596 = vpop.f32.mrf.mxu0
    %v597 = vadd.f32 %v551, %v596
    %598 = vmatmul.bf16.gmra.mxu0 %v161
    %v599 = vpop.f32.mrf.mxu0
    %v600 = vadd.f32 %v551, %v599
    %v601 = vpop.f32.mrf.mxu0
    %v602 = vadd.f32 %v551, %v601
    %603 = vmatmul.bf16.gmra.mxu0 %v164
    %v604 = vpop.f32.mrf.mxu0
    %v605 = vadd.f32 %v551, %v604
    %v606 = vpop.f32.mrf.mxu0
    %v607 = vadd.f32 %v551, %v606
    %608 = vmatmul.bf16.gmra.mxu0 %v167
    %v609 = vpop.f32.mrf.mxu0
    %v610 = vadd.f32 %v551, %v609
    %v611 = vpop.f32.mrf.mxu0
    %v612 = vadd.f32 %v551, %v611
    %613 = vdwg.mxu0
    %v614 = vpack.c.bf16 %v575, %v575
    %v615 = vpack.c.bf16 %v577, %v577
    %v616 = vpack.c.bf16 %v580, %v580
    %v617 = vpack.c.bf16 %v582, %v582
    %v618 = vpack.c.bf16 %v585, %v585
    %v619 = vpack.c.bf16 %v587, %v587
    %v620 = vpack.c.bf16 %v590, %v590
    %v621 = vpack.c.bf16 %v592, %v592
    %v622 = vpack.c.bf16 %v595, %v595
    %v623 = vpack.c.bf16 %v597, %v597
    %v624 = vpack.c.bf16 %v600, %v600
    %v625 = vpack.c.bf16 %v602, %v602
    %v626 = vpack.c.bf16 %v605, %v605
    %v627 = vpack.c.bf16 %v607, %v607
    %v628 = vpack.c.bf16 %v610, %v610
    %v629 = vpack.c.bf16 %v612, %v612
    %s630 = scalar_lea.vmem %s7, 192
    %631 = vst.msk [vmem:[%s630] sm:$0xf] %vm234, %v614
    %632 = vst.msk [vmem:[%s630 + $0x4] sm:$0xf] %vm234, %v615
    %633 = vst.msk [vmem:[%s630 + $0x8] sm:$0xf] %vm234, %v616
    %634 = vst.msk [vmem:[%s630 + $0xc] sm:$0xf] %vm234, %v617
    %635 = vst.msk [vmem:[%s630 + $0x10] sm:$0xf] %vm234, %v618
    %636 = vst.msk [vmem:[%s630 + $0x14] sm:$0xf] %vm234, %v619
    %637 = vst.msk [vmem:[%s630 + $0x18] sm:$0xf] %vm234, %v620
    %638 = vst.msk [vmem:[%s630 + $0x1c] sm:$0xf] %vm234, %v621
    %639 = vst.msk [vmem:[%s630 + $0x20] sm:$0xf] %vm234, %v622
    %640 = vst.msk [vmem:[%s630 + $0x24] sm:$0xf] %vm234, %v623
    %641 = vst.msk [vmem:[%s630 + $0x28] sm:$0xf] %vm234, %v624
    %642 = vst.msk [vmem:[%s630 + $0x2c] sm:$0xf] %vm234, %v625
    %643 = vst.msk [vmem:[%s630 + $0x30] sm:$0xf] %vm234, %v626
    %644 = vst.msk [vmem:[%s630 + $0x34] sm:$0xf] %vm234, %v627
    %645 = vst.msk [vmem:[%s630 + $0x38] sm:$0xf] %vm234, %v628
    %646 = vst.msk [vmem:[%s630 + $0x3c] sm:$0xf] %vm234, %v629
    %s647 = scalar_lea.vmem %s2, 8
    %v648 = vld [vmem:[%s647] sm:$0x3]
    %s649 = scalar_lea.vmem %s3, 16
    %v650 = vld [vmem:[%s649] sm:$0xf]
    %652 = vset.pattern.permute.xlu0 0
    %653 = vperm.xlu0 %652, %v650
    %v654 = vpop.permute.xlu0 %653
    %v657 = vsel %vm66, %v648, 0
    %659 = vmatpush.bf16.msra.mxu0 0
    %660 = vmatpush.bf16.msra.mxu0 0
    %661 = vmatpush.bf16.msra.mxu0 0
    %662 = vmatpush.bf16.msra.mxu0 0
    %663 = vmatpush.bf16.msra.mxu0 0
    %664 = vmatpush.bf16.msra.mxu0 0
    %665 = vmatpush.bf16.msra.mxu0 %v63
    %666 = vmatpush.bf16.msra.mxu0 %v62
    %667 = vmatmul.bf16.gmra.mxu0 %v657
    %v668 = vpop.f32.mrf.mxu0
    %v669 = vadd.f32 %v654, %v668
    %v670 = vpop.f32.mrf.mxu0
    %671 = vdwg.mxu0
    %v672 = vpack.c.bf16 %v669, %v669
    %s673 = scalar_lea.vmem [#allocation2], 8
    %674 = vst [vmem:[%s673] sm:$0x3] %v672
    %s675 = scalar_lea.vmem %s4, 64
    %v676 = vld [vmem:[%s675] sm:$0xf]
    %v677 = vld [vmem:[%s675 + $0x4] sm:$0xf]
    %v678 = vld [vmem:[%s675 + $0x8] sm:$0xf]
    %v679 = vld [vmem:[%s675 + $0xc] sm:$0xf]
    %s680 = scalar_lea.vmem %s5, 4
    %v681 = vld [vmem:[%s680] sm:$0x1]
    %v683 = vperm.slane %v681, 0
    %v689 = vunpack.c.l.b16 %v676
    %v690 = vunpack.c.l.b16 %v677
    %v691 = vunpack.c.l.b16 %v678
    %v692 = vunpack.c.l.b16 %v679
    %v693 = vpack.c.b16 %v690, %v689
    %v694 = vpack.c.b16 %v692, %v691
    %697 = vmatpush.bf16.msra.mxu0 0
    %698 = vmatpush.bf16.msra.mxu0 0
    %699 = vmatpush.bf16.msra.mxu0 0
    %700 = vmatpush.bf16.msra.mxu0 0
    %701 = vmatpush.bf16.msra.mxu0 0
    %702 = vmatpush.bf16.msra.mxu0 0
    %703 = vmatpush.bf16.msra.mxu0 %v694
    %704 = vmatpush.bf16.msra.mxu0 %v693
    %705 = vmatmul.bf16.gmra.mxu0 %v146
    %v706 = vpop.f32.mrf.mxu0
    %v707 = vadd.f32 %v683, %v706
    %v708 = vpop.f32.mrf.mxu0
    %v709 = vadd.f32 %v683, %v708
    %710 = vmatmul.bf16.gmra.mxu0 %v149
    %v711 = vpop.f32.mrf.mxu0
    %v712 = vadd.f32 %v683, %v711
    %v713 = vpop.f32.mrf.mxu0
    %v714 = vadd.f32 %v683, %v713
    %715 = vmatmul.bf16.gmra.mxu0 %v152
    %v716 = vpop.f32.mrf.mxu0
    %v717 = vadd.f32 %v683, %v716
    %v718 = vpop.f32.mrf.mxu0
    %v719 = vadd.f32 %v683, %v718
    %720 = vmatmul.bf16.gmra.mxu0 %v155
    %v721 = vpop.f32.mrf.mxu0
    %v722 = vadd.f32 %v683, %v721
    %v723 = vpop.f32.mrf.mxu0
    %v724 = vadd.f32 %v683, %v723
    %725 = vmatmul.bf16.gmra.mxu0 %v158
    %v726 = vpop.f32.mrf.mxu0
    %v727 = vadd.f32 %v683, %v726
    %v728 = vpop.f32.mrf.mxu0
    %v729 = vadd.f32 %v683, %v728
    %730 = vmatmul.bf16.gmra.mxu0 %v161
    %v731 = vpop.f32.mrf.mxu0
    %v732 = vadd.f32 %v683, %v731
    %v733 = vpop.f32.mrf.mxu0
    %v734 = vadd.f32 %v683, %v733
    %735 = vmatmul.bf16.gmra.mxu0 %v164
    %v736 = vpop.f32.mrf.mxu0
    %v737 = vadd.f32 %v683, %v736
    %v738 = vpop.f32.mrf.mxu0
    %v739 = vadd.f32 %v683, %v738
    %740 = vmatmul.bf16.gmra.mxu0 %v167
    %v741 = vpop.f32.mrf.mxu0
    %v742 = vadd.f32 %v683, %v741
    %v743 = vpop.f32.mrf.mxu0
    %v744 = vadd.f32 %v683, %v743
    %745 = vdwg.mxu0
    %v746 = vpack.c.bf16 %v707, %v707
    %v747 = vpack.c.bf16 %v709, %v709
    %v748 = vpack.c.bf16 %v712, %v712
    %v749 = vpack.c.bf16 %v714, %v714
    %v750 = vpack.c.bf16 %v717, %v717
    %v751 = vpack.c.bf16 %v719, %v719
    %v752 = vpack.c.bf16 %v722, %v722
    %v753 = vpack.c.bf16 %v724, %v724
    %v754 = vpack.c.bf16 %v727, %v727
    %v755 = vpack.c.bf16 %v729, %v729
    %v756 = vpack.c.bf16 %v732, %v732
    %v757 = vpack.c.bf16 %v734, %v734
    %v758 = vpack.c.bf16 %v737, %v737
    %v759 = vpack.c.bf16 %v739, %v739
    %v760 = vpack.c.bf16 %v742, %v742
    %v761 = vpack.c.bf16 %v744, %v744
    %s762 = scalar_lea.vmem %s7, 256
    %763 = vst.msk [vmem:[%s762] sm:$0xf] %vm234, %v746
    %764 = vst.msk [vmem:[%s762 + $0x4] sm:$0xf] %vm234, %v747
    %765 = vst.msk [vmem:[%s762 + $0x8] sm:$0xf] %vm234, %v748
    %766 = vst.msk [vmem:[%s762 + $0xc] sm:$0xf] %vm234, %v749
    %767 = vst.msk [vmem:[%s762 + $0x10] sm:$0xf] %vm234, %v750
    %768 = vst.msk [vmem:[%s762 + $0x14] sm:$0xf] %vm234, %v751
    %769 = vst.msk [vmem:[%s762 + $0x18] sm:$0xf] %vm234, %v752
    %770 = vst.msk [vmem:[%s762 + $0x1c] sm:$0xf] %vm234, %v753
    %771 = vst.msk [vmem:[%s762 + $0x20] sm:$0xf] %vm234, %v754
    %772 = vst.msk [vmem:[%s762 + $0x24] sm:$0xf] %vm234, %v755
    %773 = vst.msk [vmem:[%s762 + $0x28] sm:$0xf] %vm234, %v756
    %774 = vst.msk [vmem:[%s762 + $0x2c] sm:$0xf] %vm234, %v757
    %775 = vst.msk [vmem:[%s762 + $0x30] sm:$0xf] %vm234, %v758
    %776 = vst.msk [vmem:[%s762 + $0x34] sm:$0xf] %vm234, %v759
    %777 = vst.msk [vmem:[%s762 + $0x38] sm:$0xf] %vm234, %v760
    %778 = vst.msk [vmem:[%s762 + $0x3c] sm:$0xf] %vm234, %v761
    %s779 = scalar_lea.vmem %s2, 10
    %v780 = vld [vmem:[%s779] sm:$0x3]
    %s781 = scalar_lea.vmem %s3, 20
    %v782 = vld [vmem:[%s781] sm:$0xf]
    %784 = vset.pattern.permute.xlu0 0
    %785 = vperm.xlu0 %784, %v782
    %v786 = vpop.permute.xlu0 %785
    %v789 = vsel %vm66, %v780, 0
    %791 = vmatpush.bf16.msra.mxu0 0
    %792 = vmatpush.bf16.msra.mxu0 0
    %793 = vmatpush.bf16.msra.mxu0 0
    %794 = vmatpush.bf16.msra.mxu0 0
    %795 = vmatpush.bf16.msra.mxu0 0
    %796 = vmatpush.bf16.msra.mxu0 0
    %797 = vmatpush.bf16.msra.mxu0 %v63
    %798 = vmatpush.bf16.msra.mxu0 %v62
    %799 = vmatmul.bf16.gmra.mxu0 %v789
    %v800 = vpop.f32.mrf.mxu0
    %v801 = vadd.f32 %v786, %v800
    %v802 = vpop.f32.mrf.mxu0
    %803 = vdwg.mxu0
    %v804 = vpack.c.bf16 %v801, %v801
    %s805 = scalar_lea.vmem [#allocation2], 10
    %806 = vst [vmem:[%s805] sm:$0x3] %v804
    %s807 = scalar_lea.vmem %s4, 80
    %v808 = vld [vmem:[%s807] sm:$0xf]
    %v809 = vld [vmem:[%s807 + $0x4] sm:$0xf]
    %v810 = vld [vmem:[%s807 + $0x8] sm:$0xf]
    %v811 = vld [vmem:[%s807 + $0xc] sm:$0xf]
    %s812 = scalar_lea.vmem %s5, 5
    %v813 = vld [vmem:[%s812] sm:$0x1]
    %v815 = vperm.slane %v813, 0
    %v821 = vunpack.c.l.b16 %v808
    %v822 = vunpack.c.l.b16 %v809
    %v823 = vunpack.c.l.b16 %v810
    %v824 = vunpack.c.l.b16 %v811
    %v825 = vpack.c.b16 %v822, %v821
    %v826 = vpack.c.b16 %v824, %v823
    %829 = vmatpush.bf16.msra.mxu0 0
    %830 = vmatpush.bf16.msra.mxu0 0
    %831 = vmatpush.bf16.msra.mxu0 0
    %832 = vmatpush.bf16.msra.mxu0 0
    %833 = vmatpush.bf16.msra.mxu0 0
    %834 = vmatpush.bf16.msra.mxu0 0
    %835 = vmatpush.bf16.msra.mxu0 %v826
    %836 = vmatpush.bf16.msra.mxu0 %v825
    %837 = vmatmul.bf16.gmra.mxu0 %v146
    %v838 = vpop.f32.mrf.mxu0
    %v839 = vadd.f32 %v815, %v838
    %v840 = vpop.f32.mrf.mxu0
    %v841 = vadd.f32 %v815, %v840
    %842 = vmatmul.bf16.gmra.mxu0 %v149
    %v843 = vpop.f32.mrf.mxu0
    %v844 = vadd.f32 %v815, %v843
    %v845 = vpop.f32.mrf.mxu0
    %v846 = vadd.f32 %v815, %v845
    %847 = vmatmul.bf16.gmra.mxu0 %v152
    %v848 = vpop.f32.mrf.mxu0
    %v849 = vadd.f32 %v815, %v848
    %v850 = vpop.f32.mrf.mxu0
    %v851 = vadd.f32 %v815, %v850
    %852 = vmatmul.bf16.gmra.mxu0 %v155
    %v853 = vpop.f32.mrf.mxu0
    %v854 = vadd.f32 %v815, %v853
    %v855 = vpop.f32.mrf.mxu0
    %v856 = vadd.f32 %v815, %v855
    %857 = vmatmul.bf16.gmra.mxu0 %v158
    %v858 = vpop.f32.mrf.mxu0
    %v859 = vadd.f32 %v815, %v858
    %v860 = vpop.f32.mrf.mxu0
    %v861 = vadd.f32 %v815, %v860
    %862 = vmatmul.bf16.gmra.mxu0 %v161
    %v863 = vpop.f32.mrf.mxu0
    %v864 = vadd.f32 %v815, %v863
    %v865 = vpop.f32.mrf.mxu0
    %v866 = vadd.f32 %v815, %v865
    %867 = vmatmul.bf16.gmra.mxu0 %v164
    %v868 = vpop.f32.mrf.mxu0
    %v869 = vadd.f32 %v815, %v868
    %v870 = vpop.f32.mrf.mxu0
    %v871 = vadd.f32 %v815, %v870
    %872 = vmatmul.bf16.gmra.mxu0 %v167
    %v873 = vpop.f32.mrf.mxu0
    %v874 = vadd.f32 %v815, %v873
    %v875 = vpop.f32.mrf.mxu0
    %v876 = vadd.f32 %v815, %v875
    %877 = vdwg.mxu0
    %v878 = vpack.c.bf16 %v839, %v839
    %v879 = vpack.c.bf16 %v841, %v841
    %v880 = vpack.c.bf16 %v844, %v844
    %v881 = vpack.c.bf16 %v846, %v846
    %v882 = vpack.c.bf16 %v849, %v849
    %v883 = vpack.c.bf16 %v851, %v851
    %v884 = vpack.c.bf16 %v854, %v854
    %v885 = vpack.c.bf16 %v856, %v856
    %v886 = vpack.c.bf16 %v859, %v859
    %v887 = vpack.c.bf16 %v861, %v861
    %v888 = vpack.c.bf16 %v864, %v864
    %v889 = vpack.c.bf16 %v866, %v866
    %v890 = vpack.c.bf16 %v869, %v869
    %v891 = vpack.c.bf16 %v871, %v871
    %v892 = vpack.c.bf16 %v874, %v874
    %v893 = vpack.c.bf16 %v876, %v876
    %s894 = scalar_lea.vmem %s7, 320
    %895 = vst.msk [vmem:[%s894] sm:$0xf] %vm234, %v878
    %896 = vst.msk [vmem:[%s894 + $0x4] sm:$0xf] %vm234, %v879
    %897 = vst.msk [vmem:[%s894 + $0x8] sm:$0xf] %vm234, %v880
    %898 = vst.msk [vmem:[%s894 + $0xc] sm:$0xf] %vm234, %v881
    %899 = vst.msk [vmem:[%s894 + $0x10] sm:$0xf] %vm234, %v882
    %900 = vst.msk [vmem:[%s894 + $0x14] sm:$0xf] %vm234, %v883
    %901 = vst.msk [vmem:[%s894 + $0x18] sm:$0xf] %vm234, %v884
    %902 = vst.msk [vmem:[%s894 + $0x1c] sm:$0xf] %vm234, %v885
    %903 = vst.msk [vmem:[%s894 + $0x20] sm:$0xf] %vm234, %v886
    %904 = vst.msk [vmem:[%s894 + $0x24] sm:$0xf] %vm234, %v887
    %905 = vst.msk [vmem:[%s894 + $0x28] sm:$0xf] %vm234, %v888
    %906 = vst.msk [vmem:[%s894 + $0x2c] sm:$0xf] %vm234, %v889
    %907 = vst.msk [vmem:[%s894 + $0x30] sm:$0xf] %vm234, %v890
    %908 = vst.msk [vmem:[%s894 + $0x34] sm:$0xf] %vm234, %v891
    %909 = vst.msk [vmem:[%s894 + $0x38] sm:$0xf] %vm234, %v892
    %910 = vst.msk [vmem:[%s894 + $0x3c] sm:$0xf] %vm234, %v893
    %s911 = scalar_lea.vmem %s2, 12
    %v912 = vld [vmem:[%s911] sm:$0x3]
    %s913 = scalar_lea.vmem %s3, 24
    %v914 = vld [vmem:[%s913] sm:$0xf]
    %916 = vset.pattern.permute.xlu0 0
    %917 = vperm.xlu0 %916, %v914
    %v918 = vpop.permute.xlu0 %917
    %v921 = vsel %vm66, %v912, 0
    %923 = vmatpush.bf16.msra.mxu0 0
    %924 = vmatpush.bf16.msra.mxu0 0
    %925 = vmatpush.bf16.msra.mxu0 0
    %926 = vmatpush.bf16.msra.mxu0 0
    %927 = vmatpush.bf16.msra.mxu0 0
    %928 = vmatpush.bf16.msra.mxu0 0
    %929 = vmatpush.bf16.msra.mxu0 %v63
    %930 = vmatpush.bf16.msra.mxu0 %v62
    %931 = vmatmul.bf16.gmra.mxu0 %v921
    %v932 = vpop.f32.mrf.mxu0
    %v933 = vadd.f32 %v918, %v932
    %v934 = vpop.f32.mrf.mxu0
    %935 = vdwg.mxu0
    %v936 = vpack.c.bf16 %v933, %v933
    %s937 = scalar_lea.vmem [#allocation2], 12
    %938 = vst [vmem:[%s937] sm:$0x3] %v936
    %s939 = scalar_lea.vmem %s4, 96
    %v940 = vld [vmem:[%s939] sm:$0xf]
    %v941 = vld [vmem:[%s939 + $0x4] sm:$0xf]
    %v942 = vld [vmem:[%s939 + $0x8] sm:$0xf]
    %v943 = vld [vmem:[%s939 + $0xc] sm:$0xf]
    %s944 = scalar_lea.vmem %s5, 6
    %v945 = vld [vmem:[%s944] sm:$0x1]
    %v947 = vperm.slane %v945, 0
    %v953 = vunpack.c.l.b16 %v940
    %v954 = vunpack.c.l.b16 %v941
    %v955 = vunpack.c.l.b16 %v942
    %v956 = vunpack.c.l.b16 %v943
    %v957 = vpack.c.b16 %v954, %v953
    %v958 = vpack.c.b16 %v956, %v955
    %961 = vmatpush.bf16.msra.mxu0 0
    %962 = vmatpush.bf16.msra.mxu0 0
    %963 = vmatpush.bf16.msra.mxu0 0
    %964 = vmatpush.bf16.msra.mxu0 0
    %965 = vmatpush.bf16.msra.mxu0 0
    %966 = vmatpush.bf16.msra.mxu0 0
    %967 = vmatpush.bf16.msra.mxu0 %v958
    %968 = vmatpush.bf16.msra.mxu0 %v957
    %969 = vmatmul.bf16.gmra.mxu0 %v146
    %v970 = vpop.f32.mrf.mxu0
    %v971 = vadd.f32 %v947, %v970
    %v972 = vpop.f32.mrf.mxu0
    %v973 = vadd.f32 %v947, %v972
    %974 = vmatmul.bf16.gmra.mxu0 %v149
    %v975 = vpop.f32.mrf.mxu0
    %v976 = vadd.f32 %v947, %v975
    %v977 = vpop.f32.mrf.mxu0
    %v978 = vadd.f32 %v947, %v977
    %979 = vmatmul.bf16.gmra.mxu0 %v152
    %v980 = vpop.f32.mrf.mxu0
    %v981 = vadd.f32 %v947, %v980
    %v982 = vpop.f32.mrf.mxu0
    %v983 = vadd.f32 %v947, %v982
    %984 = vmatmul.bf16.gmra.mxu0 %v155
    %v985 = vpop.f32.mrf.mxu0
    %v986 = vadd.f32 %v947, %v985
    %v987 = vpop.f32.mrf.mxu0
    %v988 = vadd.f32 %v947, %v987
    %989 = vmatmul.bf16.gmra.mxu0 %v158
    %v990 = vpop.f32.mrf.mxu0
    %v991 = vadd.f32 %v947, %v990
    %v992 = vpop.f32.mrf.mxu0
    %v993 = vadd.f32 %v947, %v992
    %994 = vmatmul.bf16.gmra.mxu0 %v161
    %v995 = vpop.f32.mrf.mxu0
    %v996 = vadd.f32 %v947, %v995
    %v997 = vpop.f32.mrf.mxu0
    %v998 = vadd.f32 %v947, %v997
    %999 = vmatmul.bf16.gmra.mxu0 %v164
    %v1000 = vpop.f32.mrf.mxu0
    %v1001 = vadd.f32 %v947, %v1000
    %v1002 = vpop.f32.mrf.mxu0
    %v1003 = vadd.f32 %v947, %v1002
    %1004 = vmatmul.bf16.gmra.mxu0 %v167
    %v1005 = vpop.f32.mrf.mxu0
    %v1006 = vadd.f32 %v947, %v1005
    %v1007 = vpop.f32.mrf.mxu0
    %v1008 = vadd.f32 %v947, %v1007
    %1009 = vdwg.mxu0
    %v1010 = vpack.c.bf16 %v971, %v971
    %v1011 = vpack.c.bf16 %v973, %v973
    %v1012 = vpack.c.bf16 %v976, %v976
    %v1013 = vpack.c.bf16 %v978, %v978
    %v1014 = vpack.c.bf16 %v981, %v981
    %v1015 = vpack.c.bf16 %v983, %v983
    %v1016 = vpack.c.bf16 %v986, %v986
    %v1017 = vpack.c.bf16 %v988, %v988
    %v1018 = vpack.c.bf16 %v991, %v991
    %v1019 = vpack.c.bf16 %v993, %v993
    %v1020 = vpack.c.bf16 %v996, %v996
    %v1021 = vpack.c.bf16 %v998, %v998
    %v1022 = vpack.c.bf16 %v1001, %v1001
    %v1023 = vpack.c.bf16 %v1003, %v1003
    %v1024 = vpack.c.bf16 %v1006, %v1006
    %v1025 = vpack.c.bf16 %v1008, %v1008
    %s1026 = scalar_lea.vmem %s7, 384
    %1027 = vst.msk [vmem:[%s1026] sm:$0xf] %vm234, %v1010
    %1028 = vst.msk [vmem:[%s1026 + $0x4] sm:$0xf] %vm234, %v1011
    %1029 = vst.msk [vmem:[%s1026 + $0x8] sm:$0xf] %vm234, %v1012
    %1030 = vst.msk [vmem:[%s1026 + $0xc] sm:$0xf] %vm234, %v1013
    %1031 = vst.msk [vmem:[%s1026 + $0x10] sm:$0xf] %vm234, %v1014
    %1032 = vst.msk [vmem:[%s1026 + $0x14] sm:$0xf] %vm234, %v1015
    %1033 = vst.msk [vmem:[%s1026 + $0x18] sm:$0xf] %vm234, %v1016
    %1034 = vst.msk [vmem:[%s1026 + $0x1c] sm:$0xf] %vm234, %v1017
    %1035 = vst.msk [vmem:[%s1026 + $0x20] sm:$0xf] %vm234, %v1018
    %1036 = vst.msk [vmem:[%s1026 + $0x24] sm:$0xf] %vm234, %v1019
    %1037 = vst.msk [vmem:[%s1026 + $0x28] sm:$0xf] %vm234, %v1020
    %1038 = vst.msk [vmem:[%s1026 + $0x2c] sm:$0xf] %vm234, %v1021
    %1039 = vst.msk [vmem:[%s1026 + $0x30] sm:$0xf] %vm234, %v1022
    %1040 = vst.msk [vmem:[%s1026 + $0x34] sm:$0xf] %vm234, %v1023
    %1041 = vst.msk [vmem:[%s1026 + $0x38] sm:$0xf] %vm234, %v1024
    %1042 = vst.msk [vmem:[%s1026 + $0x3c] sm:$0xf] %vm234, %v1025
    %s1043 = scalar_lea.vmem %s2, 14
    %v1044 = vld [vmem:[%s1043] sm:$0x3]
    %s1045 = scalar_lea.vmem %s3, 28
    %v1046 = vld [vmem:[%s1045] sm:$0xf]
    %1048 = vset.pattern.permute.xlu0 0
    %1049 = vperm.xlu0 %1048, %v1046
    %v1050 = vpop.permute.xlu0 %1049
    %v1053 = vsel %vm66, %v1044, 0
    %1055 = vmatpush.bf16.msra.mxu0 0
    %1056 = vmatpush.bf16.msra.mxu0 0
    %1057 = vmatpush.bf16.msra.mxu0 0
    %1058 = vmatpush.bf16.msra.mxu0 0
    %1059 = vmatpush.bf16.msra.mxu0 0
    %1060 = vmatpush.bf16.msra.mxu0 0
    %1061 = vmatpush.bf16.msra.mxu0 %v63
    %1062 = vmatpush.bf16.msra.mxu0 %v62
    %1063 = vmatmul.bf16.gmra.mxu0 %v1053
    %v1064 = vpop.f32.mrf.mxu0
    %v1065 = vadd.f32 %v1050, %v1064
    %v1066 = vpop.f32.mrf.mxu0
    %1067 = vdwg.mxu0
    %v1068 = vpack.c.bf16 %v1065, %v1065
    %s1069 = scalar_lea.vmem [#allocation2], 14
    %1070 = vst [vmem:[%s1069] sm:$0x3] %v1068
    %s1071 = scalar_lea.vmem %s4, 112
    %v1072 = vld [vmem:[%s1071] sm:$0xf]
    %v1073 = vld [vmem:[%s1071 + $0x4] sm:$0xf]
    %v1074 = vld [vmem:[%s1071 + $0x8] sm:$0xf]
    %v1075 = vld [vmem:[%s1071 + $0xc] sm:$0xf]
    %s1076 = scalar_lea.vmem %s5, 7
    %v1077 = vld [vmem:[%s1076] sm:$0x1]
    %v1079 = vperm.slane %v1077, 0
    %v1085 = vunpack.c.l.b16 %v1072
    %v1086 = vunpack.c.l.b16 %v1073
    %v1087 = vunpack.c.l.b16 %v1074
    %v1088 = vunpack.c.l.b16 %v1075
    %v1089 = vpack.c.b16 %v1086, %v1085
    %v1090 = vpack.c.b16 %v1088, %v1087
    %1093 = vmatpush.bf16.msra.mxu0 0
    %1094 = vmatpush.bf16.msra.mxu0 0
    %1095 = vmatpush.bf16.msra.mxu0 0
    %1096 = vmatpush.bf16.msra.mxu0 0
    %1097 = vmatpush.bf16.msra.mxu0 0
    %1098 = vmatpush.bf16.msra.mxu0 0
    %1099 = vmatpush.bf16.msra.mxu0 %v1090
    %1100 = vmatpush.bf16.msra.mxu0 %v1089
    %1101 = vmatmul.bf16.gmra.mxu0 %v146
    %v1102 = vpop.f32.mrf.mxu0
    %v1103 = vadd.f32 %v1079, %v1102
    %v1104 = vpop.f32.mrf.mxu0
    %v1105 = vadd.f32 %v1079, %v1104
    %1106 = vmatmul.bf16.gmra.mxu0 %v149
    %v1107 = vpop.f32.mrf.mxu0
    %v1108 = vadd.f32 %v1079, %v1107
    %v1109 = vpop.f32.mrf.mxu0
    %v1110 = vadd.f32 %v1079, %v1109
    %1111 = vmatmul.bf16.gmra.mxu0 %v152
    %v1112 = vpop.f32.mrf.mxu0
    %v1113 = vadd.f32 %v1079, %v1112
    %v1114 = vpop.f32.mrf.mxu0
    %v1115 = vadd.f32 %v1079, %v1114
    %1116 = vmatmul.bf16.gmra.mxu0 %v155
    %v1117 = vpop.f32.mrf.mxu0
    %v1118 = vadd.f32 %v1079, %v1117
    %v1119 = vpop.f32.mrf.mxu0
    %v1120 = vadd.f32 %v1079, %v1119
    %1121 = vmatmul.bf16.gmra.mxu0 %v158
    %v1122 = vpop.f32.mrf.mxu0
    %v1123 = vadd.f32 %v1079, %v1122
    %v1124 = vpop.f32.mrf.mxu0
    %v1125 = vadd.f32 %v1079, %v1124
    %1126 = vmatmul.bf16.gmra.mxu0 %v161
    %v1127 = vpop.f32.mrf.mxu0
    %v1128 = vadd.f32 %v1079, %v1127
    %v1129 = vpop.f32.mrf.mxu0
    %v1130 = vadd.f32 %v1079, %v1129
    %1131 = vmatmul.bf16.gmra.mxu0 %v164
    %v1132 = vpop.f32.mrf.mxu0
    %v1133 = vadd.f32 %v1079, %v1132
    %v1134 = vpop.f32.mrf.mxu0
    %v1135 = vadd.f32 %v1079, %v1134
    %1136 = vmatmul.bf16.gmra.mxu0 %v167
    %v1137 = vpop.f32.mrf.mxu0
    %v1138 = vadd.f32 %v1079, %v1137
    %v1139 = vpop.f32.mrf.mxu0
    %v1140 = vadd.f32 %v1079, %v1139
    %1141 = vdwg.mxu0
    %v1142 = vpack.c.bf16 %v1103, %v1103
    %v1143 = vpack.c.bf16 %v1105, %v1105
    %v1144 = vpack.c.bf16 %v1108, %v1108
    %v1145 = vpack.c.bf16 %v1110, %v1110
    %v1146 = vpack.c.bf16 %v1113, %v1113
    %v1147 = vpack.c.bf16 %v1115, %v1115
    %v1148 = vpack.c.bf16 %v1118, %v1118
    %v1149 = vpack.c.bf16 %v1120, %v1120
    %v1150 = vpack.c.bf16 %v1123, %v1123
    %v1151 = vpack.c.bf16 %v1125, %v1125
    %v1152 = vpack.c.bf16 %v1128, %v1128
    %v1153 = vpack.c.bf16 %v1130, %v1130
    %v1154 = vpack.c.bf16 %v1133, %v1133
    %v1155 = vpack.c.bf16 %v1135, %v1135
    %v1156 = vpack.c.bf16 %v1138, %v1138
    %v1157 = vpack.c.bf16 %v1140, %v1140
    %s1158 = scalar_lea.vmem %s7, 448
    %1159 = vst.msk [vmem:[%s1158] sm:$0xf] %vm234, %v1142
    %1160 = vst.msk [vmem:[%s1158 + $0x4] sm:$0xf] %vm234, %v1143
    %1161 = vst.msk [vmem:[%s1158 + $0x8] sm:$0xf] %vm234, %v1144
    %1162 = vst.msk [vmem:[%s1158 + $0xc] sm:$0xf] %vm234, %v1145
    %1163 = vst.msk [vmem:[%s1158 + $0x10] sm:$0xf] %vm234, %v1146
    %1164 = vst.msk [vmem:[%s1158 + $0x14] sm:$0xf] %vm234, %v1147
    %1165 = vst.msk [vmem:[%s1158 + $0x18] sm:$0xf] %vm234, %v1148
    %1166 = vst.msk [vmem:[%s1158 + $0x1c] sm:$0xf] %vm234, %v1149
    %1167 = vst.msk [vmem:[%s1158 + $0x20] sm:$0xf] %vm234, %v1150
    %1168 = vst.msk [vmem:[%s1158 + $0x24] sm:$0xf] %vm234, %v1151
    %1169 = vst.msk [vmem:[%s1158 + $0x28] sm:$0xf] %vm234, %v1152
    %1170 = vst.msk [vmem:[%s1158 + $0x2c] sm:$0xf] %vm234, %v1153
    %1171 = vst.msk [vmem:[%s1158 + $0x30] sm:$0xf] %vm234, %v1154
    %1172 = vst.msk [vmem:[%s1158 + $0x34] sm:$0xf] %vm234, %v1155
    %1173 = vst.msk [vmem:[%s1158 + $0x38] sm:$0xf] %vm234, %v1156
    %1174 = vst.msk [vmem:[%s1158 + $0x3c] sm:$0xf] %vm234, %v1157
    // Predicated region
    $region26: #{tpu_custom_call.1} parent=1 // pred_check
      _
    $region27: #{tpu_custom_call.1} parent=1 // pred_check_branch
      %1176 = sbr.rel (0) target = $region29
    $region28: #{tpu_custom_call.1} parent=1 // pred_region
      %1178 = vsyncadd [#allocation3], 0
      %s1179 = sshll.u32 [#allocation2], 4
      %s1180 = int_to_ptr.vmem [resolvable:$true] %s1179
      %s1181 = sshll.u32 %s6, 4
      %s1182 = int_to_ptr.hbm [resolvable:$true] %s1181
      %1187 = dma.vmem_to_hbm [thread:$0]  %s1180, 256, %s1182, [#allocation3], 32, 32, 2
    $region29: #{tpu_custom_call.1} parent=1 // pred_fallthru
      _
    // Predicated region
    $region30: #{tpu_custom_call.1} parent=1 // pred_check
      _
    $region31: #{tpu_custom_call.1} parent=1 // pred_check_branch
      %1189 = sbr.rel (0) target = $region33
    $region32: #{tpu_custom_call.1} parent=1 // pred_region
      _
    $region33: #{tpu_custom_call.1} parent=1 // pred_fallthru
      _
    // Predicated region
    $region34: #{tpu_custom_call.1} parent=1 // pred_check
      _
    $region35: #{tpu_custom_call.1} parent=1 // pred_check_branch
      %1191 = sbr.rel (0) target = $region37
    $region36: #{tpu_custom_call.1} parent=1 // pred_region
      %1193 = dma.done [#allocation3], 256
    $region37: #{tpu_custom_call.1} parent=1 // pred_fallthru
      _
    // Predicated region
    $region38: #{tpu_custom_call.1} parent=1 // pred_check
      _
    $region39: #{tpu_custom_call.1} parent=1 // pred_check_branch
      %1195 = sbr.rel (0) target = $region41
    $region40: #{tpu_custom_call.1} parent=1 // pred_region
      _
    $region41: #{tpu_custom_call.1} parent=1 // pred_fallthru
      _
    %1196 = vsyncpa [#allocation3], 1

</llo_original>
